<compile_context>
chip_gen: v6e
topology: v6e:2x2x1
jax: 0.10.0
libtpu: 0.0.40
codegen_flags: <defaults>
</compile_context>

<pallas_src>
import jax
import jax.numpy as jnp
from jax.experimental import pallas as pl
from jax.experimental.pallas import tpu as pltpu

IN_DIM = 128
H1, H2, H3, OUT_DIM = 128, 256, 512, 1
OUT_ROWS = 8           # final (1, 512) weight padded to 8 rows (sublane-aligned)
NEG_SLOPE = 0.2


def _round_up(x, m):
    return ((x + m - 1) // m) * m


def _leaky_relu(x):
    return jnp.where(x > 0, x, NEG_SLOPE * x)


def generator_kernel(x_ref,
                     w1_ref, b1_ref,
                     w2_ref, b2_ref,
                     w3_ref, b3_ref,
                     w4_ref, b4_ref,
                     o_ref):
    """Feature-major forward pass.

    x_ref : (bt, 128) f32          -- batch tile of latents
    w*_ref: (out, in) bf16         -- PyTorch weight layout
    b*_ref: (out, 1)  f32
    o_ref : (1, bt)   f32          -- lane-dense packed output row
    """
    x_bf = x_ref[...].astype(jnp.bfloat16)            # in-kernel cast (VPU)

    # Layer 1: contract the in-dim of both operands (== W1 @ x^T), putting the
    # batch on the lane axis without ever materializing x^T.
    h = jax.lax.dot_general(w1_ref[...], x_bf,
                            (((1,), (1,)), ((), ())),
                            preferred_element_type=jnp.float32)      # (H1, bt)
    h = _leaky_relu(h + b1_ref[...]).astype(jnp.bfloat16)

    h = jnp.dot(w2_ref[...], h, preferred_element_type=jnp.float32)  # (H2, bt)
    h = _leaky_relu(h + b2_ref[...]).astype(jnp.bfloat16)

    h = jnp.dot(w3_ref[...], h, preferred_element_type=jnp.float32)  # (H3, bt)
    h = _leaky_relu(h + b3_ref[...]).astype(jnp.bfloat16)

    h = jnp.dot(w4_ref[...], h, preferred_element_type=jnp.float32)  # (8, bt)

    # Only row 0 of the padded final layer is real; tanh just that row (EUP).
    o_ref[...] = jnp.tanh(h[0:1, :] + b4_ref[0:1, :]).astype(o_ref.dtype)


def _choose_tiling(B, batch_tile):
    """Single step for small batches; even, balanced steps for large ones."""
    B_lane = _round_up(max(B, 1), 128)
    max_tile = max(128, int(batch_tile))
    n_steps = -(-B_lane // max_tile)
    if n_steps > 1 and n_steps % 2:
        n_steps += 1                  # balanced shards for 2-TensorCore parts (v7x)
    bt = _round_up(-(-B_lane // n_steps), 128)
    B_pad = n_steps * bt
    return bt, B_pad, n_steps


def _vmem_limit_bytes(bt):
    """Per-step VMEM footprint estimate with ~2x headroom (min 24 MiB)."""
    w_bytes = 2 * (H1 * IN_DIM + H2 * H1 + H3 * H2 + OUT_ROWS * H3)   # bf16 weights
    b_bytes = 512 * (H1 + H2 + H3 + OUT_ROWS)          # (out,1) f32, (8,128)-tiled
    io_bytes = bt * IN_DIM * 4 + bt * 32                # x tile + (1, bt) output
    act_bytes = bt * ((H1 + H2 + H3) * (4 + 2) + OUT_ROWS * 4)
    est = 2 * (w_bytes + b_bytes + io_bytes) + act_bytes
    return int(min(max(2 * est, 24 * 1024 * 1024), 64 * 1024 * 1024))


def generator_forward(x, prepared_params, *, batch_tile=1024):
    """x: (B, 128) float32 -> (B, 1) float32."""
    B, D = x.shape
    assert D == IN_DIM

    (w1, b1), (w2, b2), (w3, b3), (w4, b4) = prepared_params

    bt, B_pad, n_steps = _choose_tiling(B, batch_tile)
    x_p = jnp.pad(x, ((0, B_pad - B), (0, 0))) if B_pad != B else x

    # Constant-index blocks -> fetched once and kept VMEM-resident across steps.
    # (pipeline_mode=pl.Buffered(1) would shave <1 MiB here; left at default
    #  buffering for lowering safety since the footprint is tiny anyway.)
    def full(shape):
        return pl.BlockSpec(shape, lambda i: (0, 0))

    out_row = pl.pallas_call(
        generator_kernel,
        out_shape=jax.ShapeDtypeStruct((1, B_pad), jnp.float32),
        grid_spec=pltpu.PrefetchScalarGridSpec(
            num_scalar_prefetch=0,
            grid=(n_steps,),
            in_specs=[
                pl.BlockSpec((bt, IN_DIM), lambda i: (i, 0)),
                full((H1, IN_DIM)),   full((H1, 1)),
                full((H2, H1)),       full((H2, 1)),
                full((H3, H2)),       full((H3, 1)),
                full((OUT_ROWS, H3)), full((OUT_ROWS, 1)),
            ],
            out_specs=pl.BlockSpec((1, bt), lambda i: (0, i)),
        ),
        compiler_params=pltpu.CompilerParams(
            dimension_semantics=("parallel",),
            vmem_limit_bytes=_vmem_limit_bytes(bt)),
    )(x_p, w1, b1, w2, b2, w3, b3, w4, b4)

    # (1, B_pad) lane-packed row -> (B, 1)
    return out_row[0, :B].reshape(B, OUT_DIM)


def init_params(key):
    """PyTorch Linear default init: U(-1/sqrt(fan_in), +1/sqrt(fan_in)).
    Weights in PyTorch (out_features, in_features) layout; bias (out_features,)."""
    dims = [(IN_DIM, H1), (H1, H2), (H2, H3), (H3, OUT_DIM)]
    params = []
    for fan_in, fan_out in dims:
        key, kw, kb = jax.random.split(key, 3)
        bound = 1.0 / float(fan_in) ** 0.5
        w = jax.random.uniform(kw, (fan_out, fan_in), jnp.float32, -bound, bound)
        b = jax.random.uniform(kb, (fan_out,), jnp.float32, -bound, bound)
        params.append((w, b))
    return params


def prepare_params(params):
    """One-time conversion (outside the per-call path): weights -> bf16 in
    (out, in) layout, biases -> f32 column vectors; pad the (1, 512) final
    weight / bias to 8 rows so the last matmul block is sublane-aligned."""
    (w1, b1), (w2, b2), (w3, b3), (w4, b4) = params

    def cvt(w, b):
        return w.astype(jnp.bfloat16), b.astype(jnp.float32).reshape(-1, 1)

    p1, p2, p3 = cvt(w1, b1), cvt(w2, b2), cvt(w3, b3)
    w4p = jnp.pad(w4, ((0, OUT_ROWS - OUT_DIM), (0, 0))).astype(jnp.bfloat16)
    b4p = jnp.pad(b4.reshape(-1, 1),
                  ((0, OUT_ROWS - OUT_DIM), (0, 0))).astype(jnp.float32)
    return (p1, p2, p3, (w4p, b4p))


def reference_forward(x, params):
    """Pure-JAX reference mirroring the PyTorch module (f32 throughout)."""
    h = x
    for i, (w, b) in enumerate(params):
        h = h @ w.T + b
        h = jnp.where(h > 0, h, NEG_SLOPE * h) if i < 3 else jnp.tanh(h)
    return h


if __name__ == "__main__":
    key = jax.random.PRNGKey(0)
    kx, kp = jax.random.split(key)

    B = 256  # lane-aligned batch; runs as a single grid step
    x = jax.random.normal(kx, (B, IN_DIM), dtype=jnp.float32)
    params = init_params(kp)
    prepared = prepare_params(params)   # one-time bf16 conversion (not per call)

    out = generator_forward(x, prepared)
    out = jax.block_until_ready(out)

    ref = reference_forward(x, params)
    assert out.shape == (B, OUT_DIM)
    # bf16 MXU operands with f32 accumulation -> loosened tolerance (intentional).
    assert jnp.allclose(out, ref, atol=5e-2, rtol=5e-2), "mismatch vs. reference"

    print("KERNEL_OK")
</pallas_src>

<mosaic_0001>
module attributes {stable_mosaic.version = 11 : i64} {
  func.func @generator_kernel(%arg0: i32, %arg1: memref<256x128xf32, #tpu.memory_space<vmem>>, %arg2: memref<128x128xbf16, #tpu.memory_space<vmem>>, %arg3: memref<128x1xf32, #tpu.memory_space<vmem>>, %arg4: memref<256x128xbf16, #tpu.memory_space<vmem>>, %arg5: memref<256x1xf32, #tpu.memory_space<vmem>>, %arg6: memref<512x256xbf16, #tpu.memory_space<vmem>>, %arg7: memref<512x1xf32, #tpu.memory_space<vmem>>, %arg8: memref<8x512xbf16, #tpu.memory_space<vmem>>, %arg9: memref<8x1xf32, #tpu.memory_space<vmem>>, %arg10: memref<1x256xf32, #tpu.memory_space<vmem>>) attributes {dimension_semantics = [#tpu.dimension_semantics<parallel>], iteration_bounds = array<i64: 1>, scalar_prefetch = 0 : i64, scratch_operands = 0 : i64, tpu.core_type = #tpu.core_type<tc>, window_params = [{transform_indices = @transform_0, window_bounds = array<i64: 256, 128>}, {pipeline_mode = #tpu.pipeline_mode<synchronous>, transform_indices = @transform_1, window_bounds = array<i64: 128, 128>}, {pipeline_mode = #tpu.pipeline_mode<synchronous>, transform_indices = @transform_2, window_bounds = array<i64: 128, 1>}, {pipeline_mode = #tpu.pipeline_mode<synchronous>, transform_indices = @transform_3, window_bounds = array<i64: 256, 128>}, {pipeline_mode = #tpu.pipeline_mode<synchronous>, transform_indices = @transform_4, window_bounds = array<i64: 256, 1>}, {pipeline_mode = #tpu.pipeline_mode<synchronous>, transform_indices = @transform_5, window_bounds = array<i64: 512, 256>}, {pipeline_mode = #tpu.pipeline_mode<synchronous>, transform_indices = @transform_6, window_bounds = array<i64: 512, 1>}, {pipeline_mode = #tpu.pipeline_mode<synchronous>, transform_indices = @transform_7, window_bounds = array<i64: 8, 512>}, {pipeline_mode = #tpu.pipeline_mode<synchronous>, transform_indices = @transform_8, window_bounds = array<i64: 8, 1>}, {transform_indices = @transform_9, window_bounds = array<i64: 1, 256>}]} {
    %c0 = arith.constant 0 : index
    %c0_0 = arith.constant 0 : index
    %0 = vector.load %arg1[%c0, %c0_0] : memref<256x128xf32, #tpu.memory_space<vmem>>, vector<256x128xf32>
    %1 = arith.truncf %0 : vector<256x128xf32> to vector<256x128xbf16>
    %c0_1 = arith.constant 0 : index
    %c0_2 = arith.constant 0 : index
    %2 = vector.load %arg2[%c0_1, %c0_2] : memref<128x128xbf16, #tpu.memory_space<vmem>>, vector<128x128xbf16>
    %cst = arith.constant dense<0.000000e+00> : vector<128x256xf32>
    %3 = tpu.matmul %2, %1, %cst {dimension_numbers = #tpu.dot_dimension_numbers<[1], [1], [0], [0], [0, 0, 1, 0], [], []>} : vector<128x128xbf16>, vector<256x128xbf16>, vector<128x256xf32> -> vector<128x256xf32>
    %c0_3 = arith.constant 0 : index
    %c0_4 = arith.constant 0 : index
    %4 = vector.load %arg3[%c0_3, %c0_4] : memref<128x1xf32, #tpu.memory_space<vmem>>, vector<128x1xf32>
    %5 = vector.broadcast %4 : vector<128x1xf32> to vector<128x256xf32>
    %6 = arith.addf %3, %5 : vector<128x256xf32>
    %cst_5 = arith.constant 0.000000e+00 : f32
    %7 = vector.broadcast %cst_5 : f32 to vector<128x256xf32>
    %8 = arith.cmpf ogt, %6, %7 : vector<128x256xf32>
    %cst_6 = arith.constant 2.000000e-01 : f32
    %9 = vector.broadcast %cst_6 : f32 to vector<128x256xf32>
    %10 = arith.mulf %9, %6 : vector<128x256xf32>
    %11 = arith.select %8, %6, %10 : vector<128x256xi1>, vector<128x256xf32>
    %12 = arith.truncf %11 : vector<128x256xf32> to vector<128x256xbf16>
    %c0_7 = arith.constant 0 : index
    %c0_8 = arith.constant 0 : index
    %13 = vector.load %arg4[%c0_7, %c0_8] : memref<256x128xbf16, #tpu.memory_space<vmem>>, vector<256x128xbf16>
    %cst_9 = arith.constant dense<0.000000e+00> : vector<256x256xf32>
    %14 = tpu.matmul %13, %12, %cst_9 {dimension_numbers = #tpu.dot_dimension_numbers<[1], [0], [0], [1], [0, 0, 1, 1], [], []>} : vector<256x128xbf16>, vector<128x256xbf16>, vector<256x256xf32> -> vector<256x256xf32>
    %c0_10 = arith.constant 0 : index
    %c0_11 = arith.constant 0 : index
    %15 = vector.load %arg5[%c0_10, %c0_11] : memref<256x1xf32, #tpu.memory_space<vmem>>, vector<256x1xf32>
    %16 = vector.broadcast %15 : vector<256x1xf32> to vector<256x256xf32>
    %17 = arith.addf %14, %16 : vector<256x256xf32>
    %cst_12 = arith.constant 0.000000e+00 : f32
    %18 = vector.broadcast %cst_12 : f32 to vector<256x256xf32>
    %19 = arith.cmpf ogt, %17, %18 : vector<256x256xf32>
    %cst_13 = arith.constant 2.000000e-01 : f32
    %20 = vector.broadcast %cst_13 : f32 to vector<256x256xf32>
    %21 = arith.mulf %20, %17 : vector<256x256xf32>
    %22 = arith.select %19, %17, %21 : vector<256x256xi1>, vector<256x256xf32>
    %23 = arith.truncf %22 : vector<256x256xf32> to vector<256x256xbf16>
    %c0_14 = arith.constant 0 : index
    %c0_15 = arith.constant 0 : index
    %24 = vector.load %arg6[%c0_14, %c0_15] : memref<512x256xbf16, #tpu.memory_space<vmem>>, vector<512x256xbf16>
    %cst_16 = arith.constant dense<0.000000e+00> : vector<512x256xf32>
    %25 = tpu.matmul %24, %23, %cst_16 {dimension_numbers = #tpu.dot_dimension_numbers<[1], [0], [0], [1], [0, 0, 1, 1], [], []>} : vector<512x256xbf16>, vector<256x256xbf16>, vector<512x256xf32> -> vector<512x256xf32>
    %c0_17 = arith.constant 0 : index
    %c0_18 = arith.constant 0 : index
    %26 = vector.load %arg7[%c0_17, %c0_18] : memref<512x1xf32, #tpu.memory_space<vmem>>, vector<512x1xf32>
    %27 = vector.broadcast %26 : vector<512x1xf32> to vector<512x256xf32>
    %28 = arith.addf %25, %27 : vector<512x256xf32>
    %cst_19 = arith.constant 0.000000e+00 : f32
    %29 = vector.broadcast %cst_19 : f32 to vector<512x256xf32>
    %30 = arith.cmpf ogt, %28, %29 : vector<512x256xf32>
    %cst_20 = arith.constant 2.000000e-01 : f32
    %31 = vector.broadcast %cst_20 : f32 to vector<512x256xf32>
    %32 = arith.mulf %31, %28 : vector<512x256xf32>
    %33 = arith.select %30, %28, %32 : vector<512x256xi1>, vector<512x256xf32>
    %34 = arith.truncf %33 : vector<512x256xf32> to vector<512x256xbf16>
    %c0_21 = arith.constant 0 : index
    %c0_22 = arith.constant 0 : index
    %35 = vector.load %arg8[%c0_21, %c0_22] : memref<8x512xbf16, #tpu.memory_space<vmem>>, vector<8x512xbf16>
    %cst_23 = arith.constant dense<0.000000e+00> : vector<8x256xf32>
    %36 = tpu.matmul %35, %34, %cst_23 {dimension_numbers = #tpu.dot_dimension_numbers<[1], [0], [0], [1], [0, 0, 1, 1], [], []>} : vector<8x512xbf16>, vector<512x256xbf16>, vector<8x256xf32> -> vector<8x256xf32>
    %37 = vector.extract_strided_slice %36 {offsets = [0, 0], sizes = [1, 256], strides = [1, 1]} : vector<8x256xf32> to vector<1x256xf32>
    %c0_24 = arith.constant 0 : index
    %c0_25 = arith.constant 0 : index
    %38 = vector.load %arg9[%c0_24, %c0_25] : memref<8x1xf32, #tpu.memory_space<vmem>>, vector<1x1xf32>
    %39 = vector.broadcast %38 : vector<1x1xf32> to vector<1x256xf32>
    %40 = arith.addf %37, %39 : vector<1x256xf32>
    %41 = math.tanh %40 : vector<1x256xf32>
    %c0_26 = arith.constant 0 : index
    %c0_27 = arith.constant 0 : index
    %42 = vector.load %arg10[%c0_26, %c0_27] : memref<1x256xf32, #tpu.memory_space<vmem>>, vector<1x256xf32>
    tpu.vector_store %arg10[%c0_26, %c0_27], %41 {strides = array<i32>} : memref<1x256xf32, #tpu.memory_space<vmem>>, vector<1x256xf32>,
    return
  }
  func.func @transform_0(%arg0: i32) -> (i32, i32) {
    %c0_i32 = arith.constant 0 : i32
    %c0_i32_0 = arith.constant 0 : i32
    return %arg0, %c0_i32 : i32, i32
  }
  func.func @transform_1(%arg0: i32) -> (i32, i32) {
    %c0_i32 = arith.constant 0 : i32
    %c0_i32_0 = arith.constant 0 : i32
    %c0_i32_1 = arith.constant 0 : i32
    return %c0_i32, %c0_i32_0 : i32, i32
  }
  func.func @transform_2(%arg0: i32) -> (i32, i32) {
    %c0_i32 = arith.constant 0 : i32
    %c0_i32_0 = arith.constant 0 : i32
    %c0_i32_1 = arith.constant 0 : i32
    return %c0_i32, %c0_i32_0 : i32, i32
  }
  func.func @transform_3(%arg0: i32) -> (i32, i32) {
    %c0_i32 = arith.constant 0 : i32
    %c0_i32_0 = arith.constant 0 : i32
    %c0_i32_1 = arith.constant 0 : i32
    return %c0_i32, %c0_i32_0 : i32, i32
  }
  func.func @transform_4(%arg0: i32) -> (i32, i32) {
    %c0_i32 = arith.constant 0 : i32
    %c0_i32_0 = arith.constant 0 : i32
    %c0_i32_1 = arith.constant 0 : i32
    return %c0_i32, %c0_i32_0 : i32, i32
  }
  func.func @transform_5(%arg0: i32) -> (i32, i32) {
    %c0_i32 = arith.constant 0 : i32
    %c0_i32_0 = arith.constant 0 : i32
    %c0_i32_1 = arith.constant 0 : i32
    return %c0_i32, %c0_i32_0 : i32, i32
  }
  func.func @transform_6(%arg0: i32) -> (i32, i32) {
    %c0_i32 = arith.constant 0 : i32
    %c0_i32_0 = arith.constant 0 : i32
    %c0_i32_1 = arith.constant 0 : i32
    return %c0_i32, %c0_i32_0 : i32, i32
  }
  func.func @transform_7(%arg0: i32) -> (i32, i32) {
    %c0_i32 = arith.constant 0 : i32
    %c0_i32_0 = arith.constant 0 : i32
    %c0_i32_1 = arith.constant 0 : i32
    return %c0_i32, %c0_i32_0 : i32, i32
  }
  func.func @transform_8(%arg0: i32) -> (i32, i32) {
    %c0_i32 = arith.constant 0 : i32
    %c0_i32_0 = arith.constant 0 : i32
    %c0_i32_1 = arith.constant 0 : i32
    return %c0_i32, %c0_i32_0 : i32, i32
  }
  func.func @transform_9(%arg0: i32) -> (i32, i32) {
    %c0_i32 = arith.constant 0 : i32
    %c0_i32_0 = arith.constant 0 : i32
    return %c0_i32, %arg0 : i32, i32
  }
}

</mosaic_0001>

<llo_original>
// kernel: tpu_custom_call.1
$region0: #{tpu_custom_call.1}
  #allocation0 [shape = 'u32[]', space=smem, size = 0x4, offset = 0x4, fixed_abs, tag = 'smem constant byte address 0x4 - core index']
  #allocation1 [shape = 'u32[144,128]{1,0:T(1,128)}', space=vmem, size = 0x12000, scoped, tag = 'internal scratch']
  %s0 = inlined_call_operand.vmem [shape: f32[256,128], index: 0, kind: input, shape index: {}]
  %s1 = inlined_call_operand.hbm [shape: bf16[128,128], index: 1, kind: input, shape index: {}]
  %s2 = inlined_call_operand.vmem [shape: f32[128,1], index: 2, kind: input, shape index: {}]
  %s3 = inlined_call_operand.vmem [shape: bf16[256,128], index: 3, kind: input, shape index: {}]
  %s4 = inlined_call_operand.vmem [shape: f32[256,1], index: 4, kind: input, shape index: {}]
  %s5 = inlined_call_operand.vmem [shape: bf16[512,256], index: 5, kind: input, shape index: {}]
  %s6 = inlined_call_operand.vmem [shape: f32[512,1], index: 6, kind: input, shape index: {}]
  %s7 = inlined_call_operand.vmem [shape: bf16[8,512], index: 7, kind: input, shape index: {}]
  %s8 = inlined_call_operand.vmem [shape: f32[8,1], index: 8, kind: input, shape index: {}]
  %s9 = inlined_call_operand.hbm [shape: f32[1,256], index: 9, kind: output, shape index: {}]
  %s10 = sld [smem:[#allocation0]]
  $region50: #{tpu_custom_call.1} parent=0
    _
  %s12 = ssub.s32 1, %s10
  %s13 = scalar_select 0, %s12, %s10
  $region1: #{tpu_custom_call.1} parent=0
    #allocation2 [shape = 'u8[32768]{0}', space=vmem, size = 0x8000, scoped, tag = 'input window, operand 1, single buffered']
    #allocation3 [shape = 's32[1]{0}', space=sflag, size = 0x4, scoped, tag = 'scoped memory for tpu_custom_call.1']
    #allocation4 [shape = 's32[1]{0}', space=sflag, size = 0x4, scoped, tag = 'scoped memory for tpu_custom_call.1']
    #allocation5 [shape = 'u8[1024]{0}', space=vmem, size = 0x400, scoped, tag = 'output window, operand 0, single buffered']
    %14 = vsyncpa [#allocation3], 0
    %15 = vsyncpa [#allocation4], 0
    // Predicated region
    $region2: #{tpu_custom_call.1} parent=1 // pred_check
      _
    $region3: #{tpu_custom_call.1} parent=1 // pred_check_branch
      %17 = sbr.rel (0) target = $region5
    $region4: #{tpu_custom_call.1} parent=1 // pred_region
      _
    $region5: #{tpu_custom_call.1} parent=1 // pred_fallthru
      _
    // Predicated region
    $region6: #{tpu_custom_call.1} parent=1 // pred_check
      _
    $region7: #{tpu_custom_call.1} parent=1 // pred_check_branch
      %19 = sbr.rel (0) target = $region9
    $region8: #{tpu_custom_call.1} parent=1 // pred_region
      %s21 = ssub.s32 1024, 1024
      %22 = vsyncadd [#allocation3], %s21
      %s23 = sshll.u32 [#allocation2], 4
      %s24 = int_to_ptr.vmem [resolvable:$true] %s23
      %29 = dma.hbm_to_vmem [thread:$0]  %s1, 1024, %s24, [#allocation3], 64, 64, 4
    $region9: #{tpu_custom_call.1} parent=1 // pred_fallthru
      _
    // Predicated region
    $region10: #{tpu_custom_call.1} parent=1 // pred_check
      _
    $region11: #{tpu_custom_call.1} parent=1 // pred_check_branch
      %31 = sbr.rel (0) target = $region13
    $region12: #{tpu_custom_call.1} parent=1 // pred_region
      _
    $region13: #{tpu_custom_call.1} parent=1 // pred_fallthru
      _
    // Predicated region
    $region14: #{tpu_custom_call.1} parent=1 // pred_check
      _
    $region15: #{tpu_custom_call.1} parent=1 // pred_check_branch
      %33 = sbr.rel (0) target = $region17
    $region16: #{tpu_custom_call.1} parent=1 // pred_region
      _
    $region17: #{tpu_custom_call.1} parent=1 // pred_fallthru
      _
    // Predicated region
    $region18: #{tpu_custom_call.1} parent=1 // pred_check
      _
    $region19: #{tpu_custom_call.1} parent=1 // pred_check_branch
      %35 = sbr.rel (0) target = $region21
    $region20: #{tpu_custom_call.1} parent=1 // pred_region
      _
    $region21: #{tpu_custom_call.1} parent=1 // pred_fallthru
      _
    // Predicated region
    $region22: #{tpu_custom_call.1} parent=1 // pred_check
      _
    $region23: #{tpu_custom_call.1} parent=1 // pred_check_branch
      %37 = sbr.rel (0) target = $region25
    $region24: #{tpu_custom_call.1} parent=1 // pred_region
      _
    $region25: #{tpu_custom_call.1} parent=1 // pred_fallthru
      _
    // Predicated region
    $region26: #{tpu_custom_call.1} parent=1 // pred_check
      _
    $region27: #{tpu_custom_call.1} parent=1 // pred_check_branch
      %39 = sbr.rel (0) target = $region29
    $region28: #{tpu_custom_call.1} parent=1 // pred_region
      _
    $region29: #{tpu_custom_call.1} parent=1 // pred_fallthru
      _
    // Predicated region
    $region30: #{tpu_custom_call.1} parent=1 // pred_check
      _
    $region31: #{tpu_custom_call.1} parent=1 // pred_check_branch
      %41 = sbr.rel (0) target = $region33
    $region32: #{tpu_custom_call.1} parent=1 // pred_region
      _
    $region33: #{tpu_custom_call.1} parent=1 // pred_fallthru
      _
    // Predicated region
    $region34: #{tpu_custom_call.1} parent=1 // pred_check
      _
    $region35: #{tpu_custom_call.1} parent=1 // pred_check_branch
      %43 = sbr.rel (0) target = $region37
    $region36: #{tpu_custom_call.1} parent=1 // pred_region
      _
    $region37: #{tpu_custom_call.1} parent=1 // pred_fallthru
      _
    // Predicated region
    $region38: #{tpu_custom_call.1} parent=1 // pred_check
      _
    $region39: #{tpu_custom_call.1} parent=1 // pred_check_branch
      %45 = sbr.rel (0) target = $region41
    $region40: #{tpu_custom_call.1} parent=1 // pred_region
      %46 = dma.done [#allocation3], 1024
    $region41: #{tpu_custom_call.1} parent=1 // pred_fallthru
      _
    %v48 = vld [vmem:[%s0] sm:$0xff]
    %v49 = vld [vmem:[%s0 + $0x8] sm:$0xff]
    %v50 = vld [vmem:[%s0 + $0x10] sm:$0xff]
    %v51 = vld [vmem:[%s0 + $0x18] sm:$0xff]
    %v52 = vld [vmem:[%s0 + $0x20] sm:$0xff]
    %v53 = vld [vmem:[%s0 + $0x28] sm:$0xff]
    %v54 = vld [vmem:[%s0 + $0x30] sm:$0xff]
    %v55 = vld [vmem:[%s0 + $0x38] sm:$0xff]
    %v56 = vld [vmem:[%s0 + $0x40] sm:$0xff]
    %v57 = vld [vmem:[%s0 + $0x48] sm:$0xff]
    %v58 = vld [vmem:[%s0 + $0x50] sm:$0xff]
    %v59 = vld [vmem:[%s0 + $0x58] sm:$0xff]
    %v60 = vld [vmem:[%s0 + $0x60] sm:$0xff]
    %v61 = vld [vmem:[%s0 + $0x68] sm:$0xff]
    %v62 = vld [vmem:[%s0 + $0x70] sm:$0xff]
    %v63 = vld [vmem:[%s0 + $0x78] sm:$0xff]
    %v64 = vld [vmem:[%s0 + $0x80] sm:$0xff]
    %v65 = vld [vmem:[%s0 + $0x88] sm:$0xff]
    %v66 = vld [vmem:[%s0 + $0x90] sm:$0xff]
    %v67 = vld [vmem:[%s0 + $0x98] sm:$0xff]
    %v68 = vld [vmem:[%s0 + $0xa0] sm:$0xff]
    %v69 = vld [vmem:[%s0 + $0xa8] sm:$0xff]
    %v70 = vld [vmem:[%s0 + $0xb0] sm:$0xff]
    %v71 = vld [vmem:[%s0 + $0xb8] sm:$0xff]
    %v72 = vld [vmem:[%s0 + $0xc0] sm:$0xff]
    %v73 = vld [vmem:[%s0 + $0xc8] sm:$0xff]
    %v74 = vld [vmem:[%s0 + $0xd0] sm:$0xff]
    %v75 = vld [vmem:[%s0 + $0xd8] sm:$0xff]
    %v76 = vld [vmem:[%s0 + $0xe0] sm:$0xff]
    %v77 = vld [vmem:[%s0 + $0xe8] sm:$0xff]
    %v78 = vld [vmem:[%s0 + $0xf0] sm:$0xff]
    %v79 = vld [vmem:[%s0 + $0xf8] sm:$0xff]
    %v80 = vpack.c.bf16 %v49, %v48
    %v81 = vpack.c.bf16 %v51, %v50
    %v82 = vpack.c.bf16 %v53, %v52
    %v83 = vpack.c.bf16 %v55, %v54
    %v84 = vpack.c.bf16 %v57, %v56
    %v85 = vpack.c.bf16 %v59, %v58
    %v86 = vpack.c.bf16 %v61, %v60
    %v87 = vpack.c.bf16 %v63, %v62
    %v88 = vpack.c.bf16 %v65, %v64
    %v89 = vpack.c.bf16 %v67, %v66
    %v90 = vpack.c.bf16 %v69, %v68
    %v91 = vpack.c.bf16 %v71, %v70
    %v92 = vpack.c.bf16 %v73, %v72
    %v93 = vpack.c.bf16 %v75, %v74
    %v94 = vpack.c.bf16 %v77, %v76
    %v95 = vpack.c.bf16 %v79, %v78
    %v96 = vld [vmem:[#allocation2] sm:$0xf]
    %v97 = vld [vmem:[#allocation2 + $0x4] sm:$0xf]
    %v98 = vld [vmem:[#allocation2 + $0x8] sm:$0xf]
    %v99 = vld [vmem:[#allocation2 + $0xc] sm:$0xf]
    %v100 = vld [vmem:[#allocation2 + $0x10] sm:$0xf]
    %v101 = vld [vmem:[#allocation2 + $0x14] sm:$0xf]
    %v102 = vld [vmem:[#allocation2 + $0x18] sm:$0xf]
    %v103 = vld [vmem:[#allocation2 + $0x1c] sm:$0xf]
    %v104 = vld [vmem:[#allocation2 + $0x20] sm:$0xf]
    %v105 = vld [vmem:[#allocation2 + $0x24] sm:$0xf]
    %v106 = vld [vmem:[#allocation2 + $0x28] sm:$0xf]
    %v107 = vld [vmem:[#allocation2 + $0x2c] sm:$0xf]
    %v108 = vld [vmem:[#allocation2 + $0x30] sm:$0xf]
    %v109 = vld [vmem:[#allocation2 + $0x34] sm:$0xf]
    %v110 = vld [vmem:[#allocation2 + $0x38] sm:$0xf]
    %v111 = vld [vmem:[#allocation2 + $0x3c] sm:$0xf]
    %v112 = vld [vmem:[%s2] sm:$0xff]
    %v113 = vld [vmem:[%s2 + $0x8] sm:$0xff]
    %v114 = vld [vmem:[%s2 + $0x10] sm:$0xff]
    %v115 = vld [vmem:[%s2 + $0x18] sm:$0xff]
    %v116 = vld [vmem:[%s2 + $0x20] sm:$0xff]
    %v117 = vld [vmem:[%s2 + $0x28] sm:$0xff]
    %v118 = vld [vmem:[%s2 + $0x30] sm:$0xff]
    %v119 = vld [vmem:[%s2 + $0x38] sm:$0xff]
    %v120 = vld [vmem:[%s2 + $0x40] sm:$0xff]
    %v121 = vld [vmem:[%s2 + $0x48] sm:$0xff]
    %v122 = vld [vmem:[%s2 + $0x50] sm:$0xff]
    %v123 = vld [vmem:[%s2 + $0x58] sm:$0xff]
    %v124 = vld [vmem:[%s2 + $0x60] sm:$0xff]
    %v125 = vld [vmem:[%s2 + $0x68] sm:$0xff]
    %v126 = vld [vmem:[%s2 + $0x70] sm:$0xff]
    %v127 = vld [vmem:[%s2 + $0x78] sm:$0xff]
    %129 = vset.pattern.permute.xlu0 0
    %130 = vperm.xlu0 %129, %v112
    %v131 = vpop.permute.xlu0 %130
    %134 = vset.pattern.permute.xlu0 0
    %135 = vperm.xlu0 %134, %v113
    %v136 = vpop.permute.xlu0 %135
    %139 = vset.pattern.permute.xlu0 0
    %140 = vperm.xlu0 %139, %v114
    %v141 = vpop.permute.xlu0 %140
    %144 = vset.pattern.permute.xlu0 0
    %145 = vperm.xlu0 %144, %v115
    %v146 = vpop.permute.xlu0 %145
    %149 = vset.pattern.permute.xlu0 0
    %150 = vperm.xlu0 %149, %v116
    %v151 = vpop.permute.xlu0 %150
    %154 = vset.pattern.permute.xlu0 0
    %155 = vperm.xlu0 %154, %v117
    %v156 = vpop.permute.xlu0 %155
    %159 = vset.pattern.permute.xlu0 0
    %160 = vperm.xlu0 %159, %v118
    %v161 = vpop.permute.xlu0 %160
    %164 = vset.pattern.permute.xlu0 0
    %165 = vperm.xlu0 %164, %v119
    %v166 = vpop.permute.xlu0 %165
    %169 = vset.pattern.permute.xlu0 0
    %170 = vperm.xlu0 %169, %v120
    %v171 = vpop.permute.xlu0 %170
    %174 = vset.pattern.permute.xlu0 0
    %175 = vperm.xlu0 %174, %v121
    %v176 = vpop.permute.xlu0 %175
    %179 = vset.pattern.permute.xlu0 0
    %180 = vperm.xlu0 %179, %v122
    %v181 = vpop.permute.xlu0 %180
    %184 = vset.pattern.permute.xlu0 0
    %185 = vperm.xlu0 %184, %v123
    %v186 = vpop.permute.xlu0 %185
    %189 = vset.pattern.permute.xlu0 0
    %190 = vperm.xlu0 %189, %v124
    %v191 = vpop.permute.xlu0 %190
    %194 = vset.pattern.permute.xlu0 0
    %195 = vperm.xlu0 %194, %v125
    %v196 = vpop.permute.xlu0 %195
    %199 = vset.pattern.permute.xlu0 0
    %200 = vperm.xlu0 %199, %v126
    %v201 = vpop.permute.xlu0 %200
    %204 = vset.pattern.permute.xlu0 0
    %205 = vperm.xlu0 %204, %v127
    %v206 = vpop.permute.xlu0 %205
    %v224 = vunpack.c.l.b16 %v96
    %v225 = vunpack.c.l.b16 %v97
    %v226 = vunpack.c.l.b16 %v98
    %v227 = vunpack.c.l.b16 %v99
    %v228 = vunpack.c.l.b16 %v100
    %v229 = vunpack.c.l.b16 %v101
    %v230 = vunpack.c.l.b16 %v102
    %v231 = vunpack.c.l.b16 %v103
    %v232 = vunpack.c.l.b16 %v104
    %v233 = vunpack.c.l.b16 %v105
    %v234 = vunpack.c.l.b16 %v106
    %v235 = vunpack.c.l.b16 %v107
    %v236 = vunpack.c.l.b16 %v108
    %v237 = vunpack.c.l.b16 %v109
    %v238 = vunpack.c.l.b16 %v110
    %v239 = vunpack.c.l.b16 %v111
    %v240 = vpack.c.b16 %v225, %v224
    %v241 = vpack.c.b16 %v227, %v226
    %v242 = vpack.c.b16 %v229, %v228
    %v243 = vpack.c.b16 %v231, %v230
    %v244 = vpack.c.b16 %v233, %v232
    %v245 = vpack.c.b16 %v235, %v234
    %v246 = vpack.c.b16 %v237, %v236
    %v247 = vpack.c.b16 %v239, %v238
    %256 = vmatprep.subr.bf16.mxu0 0
    %257 = vmatpush1.bf16.xpose.msra.mxu0 %v87
    %258 = vmatprep.subr.bf16.mxu0 0
    %259 = vmatpush1.bf16.xpose.msra.mxu0 %v86
    %260 = vmatprep.subr.bf16.mxu0 0
    %261 = vmatpush1.bf16.xpose.msra.mxu0 %v85
    %262 = vmatprep.subr.bf16.mxu0 0
    %263 = vmatpush1.bf16.xpose.msra.mxu0 %v84
    %264 = vmatprep.subr.bf16.mxu0 0
    %265 = vmatpush1.bf16.xpose.msra.mxu0 %v83
    %266 = vmatprep.subr.bf16.mxu0 0
    %267 = vmatpush1.bf16.xpose.msra.mxu0 %v82
    %268 = vmatprep.subr.bf16.mxu0 0
    %269 = vmatpush1.bf16.xpose.msra.mxu0 %v81
    %270 = vmatprep.subr.bf16.mxu0 0
    %271 = vmatpush1.bf16.xpose.msra.mxu0 %v80
    %272 = vmatprep.subr.bf16.mxu0 0
    %273 = vmatpush2.bf16.xpose.msra.mxu0 %v95
    %274 = vmatprep.subr.bf16.mxu0 0
    %275 = vmatpush2.bf16.xpose.msra.mxu0 %v94
    %276 = vmatprep.subr.bf16.mxu0 0
    %277 = vmatpush2.bf16.xpose.msra.mxu0 %v93
    %278 = vmatprep.subr.bf16.mxu0 0
    %279 = vmatpush2.bf16.xpose.msra.mxu0 %v92
    %280 = vmatprep.subr.bf16.mxu0 0
    %281 = vmatpush2.bf16.xpose.msra.mxu0 %v91
    %282 = vmatprep.subr.bf16.mxu0 0
    %283 = vmatpush2.bf16.xpose.msra.mxu0 %v90
    %284 = vmatprep.subr.bf16.mxu0 0
    %285 = vmatpush2.bf16.xpose.msra.mxu0 %v89
    %286 = vmatprep.subr.bf16.mxu0 0
    %287 = vmatpush2.bf16.xpose.msra.mxu0 %v88
    %288 = vmatprep.mubr.bf16.mxu0 0
    %289 = vmatmul.mubr.bf16.gmra.mxu0 %v240
    %v290 = vpop.f32.mrf.mxu0
    %v291 = vadd.f32 %v131, %v290
    %v292 = vpop.f32.mrf.mxu0
    %v293 = vadd.f32 %v131, %v292
    %v294 = vpop.f32.mrf.mxu0
    %v295 = vadd.f32 %v136, %v294
    %v296 = vpop.f32.mrf.mxu0
    %v297 = vadd.f32 %v136, %v296
    %298 = vmatprep.mubr.bf16.mxu0 0
    %299 = vmatmul.mubr.bf16.gmra.mxu0 %v241
    %v300 = vpop.f32.mrf.mxu0
    %v301 = vadd.f32 %v141, %v300
    %v302 = vpop.f32.mrf.mxu0
    %v303 = vadd.f32 %v141, %v302
    %v304 = vpop.f32.mrf.mxu0
    %v305 = vadd.f32 %v146, %v304
    %v306 = vpop.f32.mrf.mxu0
    %v307 = vadd.f32 %v146, %v306
    %308 = vmatprep.mubr.bf16.mxu0 0
    %309 = vmatmul.mubr.bf16.gmra.mxu0 %v242
    %v310 = vpop.f32.mrf.mxu0
    %v311 = vadd.f32 %v151, %v310
    %v312 = vpop.f32.mrf.mxu0
    %v313 = vadd.f32 %v151, %v312
    %v314 = vpop.f32.mrf.mxu0
    %v315 = vadd.f32 %v156, %v314
    %v316 = vpop.f32.mrf.mxu0
    %v317 = vadd.f32 %v156, %v316
    %318 = vmatprep.mubr.bf16.mxu0 0
    %319 = vmatmul.mubr.bf16.gmra.mxu0 %v243
    %v320 = vpop.f32.mrf.mxu0
    %v321 = vadd.f32 %v161, %v320
    %v322 = vpop.f32.mrf.mxu0
    %v323 = vadd.f32 %v161, %v322
    %v324 = vpop.f32.mrf.mxu0
    %v325 = vadd.f32 %v166, %v324
    %v326 = vpop.f32.mrf.mxu0
    %v327 = vadd.f32 %v166, %v326
    %328 = vmatprep.mubr.bf16.mxu0 0
    %329 = vmatmul.mubr.bf16.gmra.mxu0 %v244
    %v330 = vpop.f32.mrf.mxu0
    %v331 = vadd.f32 %v171, %v330
    %v332 = vpop.f32.mrf.mxu0
    %v333 = vadd.f32 %v171, %v332
    %v334 = vpop.f32.mrf.mxu0
    %v335 = vadd.f32 %v176, %v334
    %v336 = vpop.f32.mrf.mxu0
    %v337 = vadd.f32 %v176, %v336
    %338 = vmatprep.mubr.bf16.mxu0 0
    %339 = vmatmul.mubr.bf16.gmra.mxu0 %v245
    %v340 = vpop.f32.mrf.mxu0
    %v341 = vadd.f32 %v181, %v340
    %v342 = vpop.f32.mrf.mxu0
    %v343 = vadd.f32 %v181, %v342
    %v344 = vpop.f32.mrf.mxu0
    %v345 = vadd.f32 %v186, %v344
    %v346 = vpop.f32.mrf.mxu0
    %v347 = vadd.f32 %v186, %v346
    %348 = vmatprep.mubr.bf16.mxu0 0
    %349 = vmatmul.mubr.bf16.gmra.mxu0 %v246
    %v350 = vpop.f32.mrf.mxu0
    %v351 = vadd.f32 %v191, %v350
    %v352 = vpop.f32.mrf.mxu0
    %v353 = vadd.f32 %v191, %v352
    %v354 = vpop.f32.mrf.mxu0
    %v355 = vadd.f32 %v196, %v354
    %v356 = vpop.f32.mrf.mxu0
    %v357 = vadd.f32 %v196, %v356
    %358 = vmatprep.mubr.bf16.mxu0 0
    %359 = vmatmul.mubr.bf16.gmra.mxu0 %v247
    %v360 = vpop.f32.mrf.mxu0
    %v361 = vadd.f32 %v201, %v360
    %v362 = vpop.f32.mrf.mxu0
    %v363 = vadd.f32 %v201, %v362
    %v364 = vpop.f32.mrf.mxu0
    %v365 = vadd.f32 %v206, %v364
    %v366 = vpop.f32.mrf.mxu0
    %v367 = vadd.f32 %v206, %v366
    %368 = vdwg.mxu0
    %vm369 = vcmp.gt.f32.partialorder %v291, 0.0
    %vm370 = vcmp.gt.f32.partialorder %v293, 0.0
    %vm371 = vcmp.gt.f32.partialorder %v295, 0.0
    %vm372 = vcmp.gt.f32.partialorder %v297, 0.0
    %vm373 = vcmp.gt.f32.partialorder %v301, 0.0
    %vm374 = vcmp.gt.f32.partialorder %v303, 0.0
    %vm375 = vcmp.gt.f32.partialorder %v305, 0.0
    %vm376 = vcmp.gt.f32.partialorder %v307, 0.0
    %vm377 = vcmp.gt.f32.partialorder %v311, 0.0
    %vm378 = vcmp.gt.f32.partialorder %v313, 0.0
    %vm379 = vcmp.gt.f32.partialorder %v315, 0.0
    %vm380 = vcmp.gt.f32.partialorder %v317, 0.0
    %vm381 = vcmp.gt.f32.partialorder %v321, 0.0
    %vm382 = vcmp.gt.f32.partialorder %v323, 0.0
    %vm383 = vcmp.gt.f32.partialorder %v325, 0.0
    %vm384 = vcmp.gt.f32.partialorder %v327, 0.0
    %vm385 = vcmp.gt.f32.partialorder %v331, 0.0
    %vm386 = vcmp.gt.f32.partialorder %v333, 0.0
    %vm387 = vcmp.gt.f32.partialorder %v335, 0.0
    %vm388 = vcmp.gt.f32.partialorder %v337, 0.0
    %vm389 = vcmp.gt.f32.partialorder %v341, 0.0
    %vm390 = vcmp.gt.f32.partialorder %v343, 0.0
    %vm391 = vcmp.gt.f32.partialorder %v345, 0.0
    %vm392 = vcmp.gt.f32.partialorder %v347, 0.0
    %vm393 = vcmp.gt.f32.partialorder %v351, 0.0
    %vm394 = vcmp.gt.f32.partialorder %v353, 0.0
    %vm395 = vcmp.gt.f32.partialorder %v355, 0.0
    %vm396 = vcmp.gt.f32.partialorder %v357, 0.0
    %vm397 = vcmp.gt.f32.partialorder %v361, 0.0
    %vm398 = vcmp.gt.f32.partialorder %v363, 0.0
    %vm399 = vcmp.gt.f32.partialorder %v365, 0.0
    %vm400 = vcmp.gt.f32.partialorder %v367, 0.0
    %v401 = vmul.f32 %v291, 0.2
    %v402 = vmul.f32 %v293, 0.2
    %v403 = vmul.f32 %v295, 0.2
    %v404 = vmul.f32 %v297, 0.2
    %v405 = vmul.f32 %v301, 0.2
    %v406 = vmul.f32 %v303, 0.2
    %v407 = vmul.f32 %v305, 0.2
    %v408 = vmul.f32 %v307, 0.2
    %v409 = vmul.f32 %v311, 0.2
    %v410 = vmul.f32 %v313, 0.2
    %v411 = vmul.f32 %v315, 0.2
    %v412 = vmul.f32 %v317, 0.2
    %v413 = vmul.f32 %v321, 0.2
    %v414 = vmul.f32 %v323, 0.2
    %v415 = vmul.f32 %v325, 0.2
    %v416 = vmul.f32 %v327, 0.2
    %v417 = vmul.f32 %v331, 0.2
    %v418 = vmul.f32 %v333, 0.2
    %v419 = vmul.f32 %v335, 0.2
    %v420 = vmul.f32 %v337, 0.2
    %v421 = vmul.f32 %v341, 0.2
    %v422 = vmul.f32 %v343, 0.2
    %v423 = vmul.f32 %v345, 0.2
    %v424 = vmul.f32 %v347, 0.2
    %v425 = vmul.f32 %v351, 0.2
    %v426 = vmul.f32 %v353, 0.2
    %v427 = vmul.f32 %v355, 0.2
    %v428 = vmul.f32 %v357, 0.2
    %v429 = vmul.f32 %v361, 0.2
    %v430 = vmul.f32 %v363, 0.2
    %v431 = vmul.f32 %v365, 0.2
    %v432 = vmul.f32 %v367, 0.2
    %v433 = vsel %vm369, %v291, %v401
    %v434 = vsel %vm370, %v293, %v402
    %v435 = vsel %vm371, %v295, %v403
    %v436 = vsel %vm372, %v297, %v404
    %v437 = vsel %vm373, %v301, %v405
    %v438 = vsel %vm374, %v303, %v406
    %v439 = vsel %vm375, %v305, %v407
    %v440 = vsel %vm376, %v307, %v408
    %v441 = vsel %vm377, %v311, %v409
    %v442 = vsel %vm378, %v313, %v410
    %v443 = vsel %vm379, %v315, %v411
    %v444 = vsel %vm380, %v317, %v412
    %v445 = vsel %vm381, %v321, %v413
    %v446 = vsel %vm382, %v323, %v414
    %v447 = vsel %vm383, %v325, %v415
    %v448 = vsel %vm384, %v327, %v416
    %v449 = vsel %vm385, %v331, %v417
    %v450 = vsel %vm386, %v333, %v418
    %v451 = vsel %vm387, %v335, %v419
    %v452 = vsel %vm388, %v337, %v420
    %v453 = vsel %vm389, %v341, %v421
    %v454 = vsel %vm390, %v343, %v422
    %v455 = vsel %vm391, %v345, %v423
    %v456 = vsel %vm392, %v347, %v424
    %v457 = vsel %vm393, %v351, %v425
    %v458 = vsel %vm394, %v353, %v426
    %v459 = vsel %vm395, %v355, %v427
    %v460 = vsel %vm396, %v357, %v428
    %v461 = vsel %vm397, %v361, %v429
    %v462 = vsel %vm398, %v363, %v430
    %v463 = vsel %vm399, %v365, %v431
    %v464 = vsel %vm400, %v367, %v432
    %v465 = vpack.c.bf16 %v435, %v433
    %v466 = vpack.c.bf16 %v436, %v434
    %v467 = vpack.c.bf16 %v439, %v437
    %v468 = vpack.c.bf16 %v440, %v438
    %v469 = vpack.c.bf16 %v443, %v441
    %v470 = vpack.c.bf16 %v444, %v442
    %v471 = vpack.c.bf16 %v447, %v445
    %v472 = vpack.c.bf16 %v448, %v446
    %v473 = vpack.c.bf16 %v451, %v449
    %v474 = vpack.c.bf16 %v452, %v450
    %v475 = vpack.c.bf16 %v455, %v453
    %v476 = vpack.c.bf16 %v456, %v454
    %v477 = vpack.c.bf16 %v459, %v457
    %v478 = vpack.c.bf16 %v460, %v458
    %v479 = vpack.c.bf16 %v463, %v461
    %v480 = vpack.c.bf16 %v464, %v462
    %v481 = vld [vmem:[%s3] sm:$0xf]
    %v482 = vld [vmem:[%s3 + $0x4] sm:$0xf]
    %v483 = vld [vmem:[%s3 + $0x8] sm:$0xf]
    %v484 = vld [vmem:[%s3 + $0xc] sm:$0xf]
    %v485 = vld [vmem:[%s3 + $0x10] sm:$0xf]
    %v486 = vld [vmem:[%s3 + $0x14] sm:$0xf]
    %v487 = vld [vmem:[%s3 + $0x18] sm:$0xf]
    %v488 = vld [vmem:[%s3 + $0x1c] sm:$0xf]
    %v489 = vld [vmem:[%s3 + $0x20] sm:$0xf]
    %v490 = vld [vmem:[%s3 + $0x24] sm:$0xf]
    %v491 = vld [vmem:[%s3 + $0x28] sm:$0xf]
    %v492 = vld [vmem:[%s3 + $0x2c] sm:$0xf]
    %v493 = vld [vmem:[%s3 + $0x30] sm:$0xf]
    %v494 = vld [vmem:[%s3 + $0x34] sm:$0xf]
    %v495 = vld [vmem:[%s3 + $0x38] sm:$0xf]
    %v496 = vld [vmem:[%s3 + $0x3c] sm:$0xf]
    %v497 = vld [vmem:[%s3 + $0x40] sm:$0xf]
    %v498 = vld [vmem:[%s3 + $0x44] sm:$0xf]
    %v499 = vld [vmem:[%s3 + $0x48] sm:$0xf]
    %v500 = vld [vmem:[%s3 + $0x4c] sm:$0xf]
    %v501 = vld [vmem:[%s3 + $0x50] sm:$0xf]
    %v502 = vld [vmem:[%s3 + $0x54] sm:$0xf]
    %v503 = vld [vmem:[%s3 + $0x58] sm:$0xf]
    %v504 = vld [vmem:[%s3 + $0x5c] sm:$0xf]
    %v505 = vld [vmem:[%s3 + $0x60] sm:$0xf]
    %v506 = vld [vmem:[%s3 + $0x64] sm:$0xf]
    %v507 = vld [vmem:[%s3 + $0x68] sm:$0xf]
    %v508 = vld [vmem:[%s3 + $0x6c] sm:$0xf]
    %v509 = vld [vmem:[%s3 + $0x70] sm:$0xf]
    %v510 = vld [vmem:[%s3 + $0x74] sm:$0xf]
    %v511 = vld [vmem:[%s3 + $0x78] sm:$0xf]
    %v512 = vld [vmem:[%s3 + $0x7c] sm:$0xf]
    %v513 = vld [vmem:[%s4] sm:$0xff]
    %v514 = vld [vmem:[%s4 + $0x8] sm:$0xff]
    %v515 = vld [vmem:[%s4 + $0x10] sm:$0xff]
    %v516 = vld [vmem:[%s4 + $0x18] sm:$0xff]
    %v517 = vld [vmem:[%s4 + $0x20] sm:$0xff]
    %v518 = vld [vmem:[%s4 + $0x28] sm:$0xff]
    %v519 = vld [vmem:[%s4 + $0x30] sm:$0xff]
    %v520 = vld [vmem:[%s4 + $0x38] sm:$0xff]
    %v521 = vld [vmem:[%s4 + $0x40] sm:$0xff]
    %v522 = vld [vmem:[%s4 + $0x48] sm:$0xff]
    %v523 = vld [vmem:[%s4 + $0x50] sm:$0xff]
    %v524 = vld [vmem:[%s4 + $0x58] sm:$0xff]
    %v525 = vld [vmem:[%s4 + $0x60] sm:$0xff]
    %v526 = vld [vmem:[%s4 + $0x68] sm:$0xff]
    %v527 = vld [vmem:[%s4 + $0x70] sm:$0xff]
    %v528 = vld [vmem:[%s4 + $0x78] sm:$0xff]
    %v529 = vld [vmem:[%s4 + $0x80] sm:$0xff]
    %v530 = vld [vmem:[%s4 + $0x88] sm:$0xff]
    %v531 = vld [vmem:[%s4 + $0x90] sm:$0xff]
    %v532 = vld [vmem:[%s4 + $0x98] sm:$0xff]
    %v533 = vld [vmem:[%s4 + $0xa0] sm:$0xff]
    %v534 = vld [vmem:[%s4 + $0xa8] sm:$0xff]
    %v535 = vld [vmem:[%s4 + $0xb0] sm:$0xff]
    %v536 = vld [vmem:[%s4 + $0xb8] sm:$0xff]
    %v537 = vld [vmem:[%s4 + $0xc0] sm:$0xff]
    %v538 = vld [vmem:[%s4 + $0xc8] sm:$0xff]
    %v539 = vld [vmem:[%s4 + $0xd0] sm:$0xff]
    %v540 = vld [vmem:[%s4 + $0xd8] sm:$0xff]
    %v541 = vld [vmem:[%s4 + $0xe0] sm:$0xff]
    %v542 = vld [vmem:[%s4 + $0xe8] sm:$0xff]
    %v543 = vld [vmem:[%s4 + $0xf0] sm:$0xff]
    %v544 = vld [vmem:[%s4 + $0xf8] sm:$0xff]
    %546 = vset.pattern.permute.xlu0 0
    %547 = vperm.xlu0 %546, %v513
    %v548 = vpop.permute.xlu0 %547
    %551 = vset.pattern.permute.xlu0 0
    %552 = vperm.xlu0 %551, %v514
    %v553 = vpop.permute.xlu0 %552
    %556 = vset.pattern.permute.xlu0 0
    %557 = vperm.xlu0 %556, %v515
    %v558 = vpop.permute.xlu0 %557
    %561 = vset.pattern.permute.xlu0 0
    %562 = vperm.xlu0 %561, %v516
    %v563 = vpop.permute.xlu0 %562
    %566 = vset.pattern.permute.xlu0 0
    %567 = vperm.xlu0 %566, %v517
    %v568 = vpop.permute.xlu0 %567
    %571 = vset.pattern.permute.xlu0 0
    %572 = vperm.xlu0 %571, %v518
    %v573 = vpop.permute.xlu0 %572
    %576 = vset.pattern.permute.xlu0 0
    %577 = vperm.xlu0 %576, %v519
    %v578 = vpop.permute.xlu0 %577
    %581 = vset.pattern.permute.xlu0 0
    %582 = vperm.xlu0 %581, %v520
    %v583 = vpop.permute.xlu0 %582
    %586 = vset.pattern.permute.xlu0 0
    %587 = vperm.xlu0 %586, %v521
    %v588 = vpop.permute.xlu0 %587
    %591 = vset.pattern.permute.xlu0 0
    %592 = vperm.xlu0 %591, %v522
    %v593 = vpop.permute.xlu0 %592
    %596 = vset.pattern.permute.xlu0 0
    %597 = vperm.xlu0 %596, %v523
    %v598 = vpop.permute.xlu0 %597
    %601 = vset.pattern.permute.xlu0 0
    %602 = vperm.xlu0 %601, %v524
    %v603 = vpop.permute.xlu0 %602
    %606 = vset.pattern.permute.xlu0 0
    %607 = vperm.xlu0 %606, %v525
    %v608 = vpop.permute.xlu0 %607
    %611 = vset.pattern.permute.xlu0 0
    %612 = vperm.xlu0 %611, %v526
    %v613 = vpop.permute.xlu0 %612
    %616 = vset.pattern.permute.xlu0 0
    %617 = vperm.xlu0 %616, %v527
    %v618 = vpop.permute.xlu0 %617
    %621 = vset.pattern.permute.xlu0 0
    %622 = vperm.xlu0 %621, %v528
    %v623 = vpop.permute.xlu0 %622
    %626 = vset.pattern.permute.xlu0 0
    %627 = vperm.xlu0 %626, %v529
    %v628 = vpop.permute.xlu0 %627
    %631 = vset.pattern.permute.xlu0 0
    %632 = vperm.xlu0 %631, %v530
    %v633 = vpop.permute.xlu0 %632
    %636 = vset.pattern.permute.xlu0 0
    %637 = vperm.xlu0 %636, %v531
    %v638 = vpop.permute.xlu0 %637
    %641 = vset.pattern.permute.xlu0 0
    %642 = vperm.xlu0 %641, %v532
    %v643 = vpop.permute.xlu0 %642
    %646 = vset.pattern.permute.xlu0 0
    %647 = vperm.xlu0 %646, %v533
    %v648 = vpop.permute.xlu0 %647
    %651 = vset.pattern.permute.xlu0 0
    %652 = vperm.xlu0 %651, %v534
    %v653 = vpop.permute.xlu0 %652
    %656 = vset.pattern.permute.xlu0 0
    %657 = vperm.xlu0 %656, %v535
    %v658 = vpop.permute.xlu0 %657
    %661 = vset.pattern.permute.xlu0 0
    %662 = vperm.xlu0 %661, %v536
    %v663 = vpop.permute.xlu0 %662
    %666 = vset.pattern.permute.xlu0 0
    %667 = vperm.xlu0 %666, %v537
    %v668 = vpop.permute.xlu0 %667
    %671 = vset.pattern.permute.xlu0 0
    %672 = vperm.xlu0 %671, %v538
    %v673 = vpop.permute.xlu0 %672
    %676 = vset.pattern.permute.xlu0 0
    %677 = vperm.xlu0 %676, %v539
    %v678 = vpop.permute.xlu0 %677
    %681 = vset.pattern.permute.xlu0 0
    %682 = vperm.xlu0 %681, %v540
    %v683 = vpop.permute.xlu0 %682
    %686 = vset.pattern.permute.xlu0 0
    %687 = vperm.xlu0 %686, %v541
    %v688 = vpop.permute.xlu0 %687
    %691 = vset.pattern.permute.xlu0 0
    %692 = vperm.xlu0 %691, %v542
    %v693 = vpop.permute.xlu0 %692
    %696 = vset.pattern.permute.xlu0 0
    %697 = vperm.xlu0 %696, %v543
    %v698 = vpop.permute.xlu0 %697
    %701 = vset.pattern.permute.xlu0 0
    %702 = vperm.xlu0 %701, %v544
    %v703 = vpop.permute.xlu0 %702
    %v737 = vunpack.c.l.b16 %v481
    %v738 = vunpack.c.l.b16 %v482
    %v739 = vunpack.c.l.b16 %v483
    %v740 = vunpack.c.l.b16 %v484
    %v741 = vunpack.c.l.b16 %v485
    %v742 = vunpack.c.l.b16 %v486
    %v743 = vunpack.c.l.b16 %v487
    %v744 = vunpack.c.l.b16 %v488
    %v745 = vunpack.c.l.b16 %v489
    %v746 = vunpack.c.l.b16 %v490
    %v747 = vunpack.c.l.b16 %v491
    %v748 = vunpack.c.l.b16 %v492
    %v749 = vunpack.c.l.b16 %v493
    %v750 = vunpack.c.l.b16 %v494
    %v751 = vunpack.c.l.b16 %v495
    %v752 = vunpack.c.l.b16 %v496
    %v753 = vunpack.c.l.b16 %v497
    %v754 = vunpack.c.l.b16 %v498
    %v755 = vunpack.c.l.b16 %v499
    %v756 = vunpack.c.l.b16 %v500
    %v757 = vunpack.c.l.b16 %v501
    %v758 = vunpack.c.l.b16 %v502
    %v759 = vunpack.c.l.b16 %v503
    %v760 = vunpack.c.l.b16 %v504
    %v761 = vunpack.c.l.b16 %v505
    %v762 = vunpack.c.l.b16 %v506
    %v763 = vunpack.c.l.b16 %v507
    %v764 = vunpack.c.l.b16 %v508
    %v765 = vunpack.c.l.b16 %v509
    %v766 = vunpack.c.l.b16 %v510
    %v767 = vunpack.c.l.b16 %v511
    %v768 = vunpack.c.l.b16 %v512
    %v769 = vpack.c.b16 %v738, %v737
    %v770 = vpack.c.b16 %v740, %v739
    %v771 = vpack.c.b16 %v742, %v741
    %v772 = vpack.c.b16 %v744, %v743
    %v773 = vpack.c.b16 %v746, %v745
    %v774 = vpack.c.b16 %v748, %v747
    %v775 = vpack.c.b16 %v750, %v749
    %v776 = vpack.c.b16 %v752, %v751
    %v777 = vpack.c.b16 %v754, %v753
    %v778 = vpack.c.b16 %v756, %v755
    %v779 = vpack.c.b16 %v758, %v757
    %v780 = vpack.c.b16 %v760, %v759
    %v781 = vpack.c.b16 %v762, %v761
    %v782 = vpack.c.b16 %v764, %v763
    %v783 = vpack.c.b16 %v766, %v765
    %v784 = vpack.c.b16 %v768, %v767
    %801 = vmatprep.subr.bf16.mxu0 %v480
    %802 = vmatpush1.bf16.msra.mxu0 %v479
    %803 = vmatprep.subr.bf16.mxu0 %v478
    %804 = vmatpush1.bf16.msra.mxu0 %v477
    %805 = vmatprep.subr.bf16.mxu0 %v476
    %806 = vmatpush1.bf16.msra.mxu0 %v475
    %807 = vmatprep.subr.bf16.mxu0 %v474
    %808 = vmatpush1.bf16.msra.mxu0 %v473
    %809 = vmatprep.subr.bf16.mxu0 %v472
    %810 = vmatpush1.bf16.msra.mxu0 %v471
    %811 = vmatprep.subr.bf16.mxu0 %v470
    %812 = vmatpush1.bf16.msra.mxu0 %v469
    %813 = vmatprep.subr.bf16.mxu0 %v468
    %814 = vmatpush1.bf16.msra.mxu0 %v467
    %815 = vmatprep.subr.bf16.mxu0 %v466
    %816 = vmatpush1.bf16.msra.mxu0 %v465
    %817 = vmatprep.subr.bf16.mxu0 0
    %818 = vmatpush2.bf16.msra.mxu0 0
    %819 = vmatprep.subr.bf16.mxu0 0
    %820 = vmatpush2.bf16.msra.mxu0 0
    %821 = vmatprep.subr.bf16.mxu0 0
    %822 = vmatpush2.bf16.msra.mxu0 0
    %823 = vmatprep.subr.bf16.mxu0 0
    %824 = vmatpush2.bf16.msra.mxu0 0
    %825 = vmatprep.subr.bf16.mxu0 0
    %826 = vmatpush2.bf16.msra.mxu0 0
    %827 = vmatprep.subr.bf16.mxu0 0
    %828 = vmatpush2.bf16.msra.mxu0 0
    %829 = vmatprep.subr.bf16.mxu0 0
    %830 = vmatpush2.bf16.msra.mxu0 0
    %831 = vmatprep.subr.bf16.mxu0 0
    %832 = vmatpush2.bf16.msra.mxu0 0
    %833 = vmatprep.mubr.bf16.mxu0 0
    %834 = vmatmul.mubr.bf16.gmra.mxu0 %v769
    %v835 = vpop.f32.mrf.mxu0
    %v836 = vadd.f32 %v548, %v835
    %v837 = vpop.f32.mrf.mxu0
    %v838 = vadd.f32 %v548, %v837
    %v839 = vpop.f32.mrf.mxu0
    %v840 = vadd.f32 %v553, %v839
    %v841 = vpop.f32.mrf.mxu0
    %v842 = vadd.f32 %v553, %v841
    %843 = vmatprep.mubr.bf16.mxu0 0
    %844 = vmatmul.mubr.bf16.gmra.mxu0 %v770
    %v845 = vpop.f32.mrf.mxu0
    %v846 = vadd.f32 %v558, %v845
    %v847 = vpop.f32.mrf.mxu0
    %v848 = vadd.f32 %v558, %v847
    %v849 = vpop.f32.mrf.mxu0
    %v850 = vadd.f32 %v563, %v849
    %v851 = vpop.f32.mrf.mxu0
    %v852 = vadd.f32 %v563, %v851
    %853 = vmatprep.mubr.bf16.mxu0 0
    %854 = vmatmul.mubr.bf16.gmra.mxu0 %v771
    %v855 = vpop.f32.mrf.mxu0
    %v856 = vadd.f32 %v568, %v855
    %v857 = vpop.f32.mrf.mxu0
    %v858 = vadd.f32 %v568, %v857
    %v859 = vpop.f32.mrf.mxu0
    %v860 = vadd.f32 %v573, %v859
    %v861 = vpop.f32.mrf.mxu0
    %v862 = vadd.f32 %v573, %v861
    %863 = vmatprep.mubr.bf16.mxu0 0
    %864 = vmatmul.mubr.bf16.gmra.mxu0 %v772
    %v865 = vpop.f32.mrf.mxu0
    %v866 = vadd.f32 %v578, %v865
    %v867 = vpop.f32.mrf.mxu0
    %v868 = vadd.f32 %v578, %v867
    %v869 = vpop.f32.mrf.mxu0
    %v870 = vadd.f32 %v583, %v869
    %v871 = vpop.f32.mrf.mxu0
    %v872 = vadd.f32 %v583, %v871
    %873 = vmatprep.mubr.bf16.mxu0 0
    %874 = vmatmul.mubr.bf16.gmra.mxu0 %v773
    %v875 = vpop.f32.mrf.mxu0
    %v876 = vadd.f32 %v588, %v875
    %v877 = vpop.f32.mrf.mxu0
    %v878 = vadd.f32 %v588, %v877
    %v879 = vpop.f32.mrf.mxu0
    %v880 = vadd.f32 %v593, %v879
    %v881 = vpop.f32.mrf.mxu0
    %v882 = vadd.f32 %v593, %v881
    %883 = vmatprep.mubr.bf16.mxu0 0
    %884 = vmatmul.mubr.bf16.gmra.mxu0 %v774
    %v885 = vpop.f32.mrf.mxu0
    %v886 = vadd.f32 %v598, %v885
    %v887 = vpop.f32.mrf.mxu0
    %v888 = vadd.f32 %v598, %v887
    %v889 = vpop.f32.mrf.mxu0
    %v890 = vadd.f32 %v603, %v889
    %v891 = vpop.f32.mrf.mxu0
    %v892 = vadd.f32 %v603, %v891
    %893 = vmatprep.mubr.bf16.mxu0 0
    %894 = vmatmul.mubr.bf16.gmra.mxu0 %v775
    %v895 = vpop.f32.mrf.mxu0
    %v896 = vadd.f32 %v608, %v895
    %v897 = vpop.f32.mrf.mxu0
    %v898 = vadd.f32 %v608, %v897
    %v899 = vpop.f32.mrf.mxu0
    %v900 = vadd.f32 %v613, %v899
    %v901 = vpop.f32.mrf.mxu0
    %v902 = vadd.f32 %v613, %v901
    %903 = vmatprep.mubr.bf16.mxu0 0
    %904 = vmatmul.mubr.bf16.gmra.mxu0 %v776
    %v905 = vpop.f32.mrf.mxu0
    %v906 = vadd.f32 %v618, %v905
    %v907 = vpop.f32.mrf.mxu0
    %v908 = vadd.f32 %v618, %v907
    %v909 = vpop.f32.mrf.mxu0
    %v910 = vadd.f32 %v623, %v909
    %v911 = vpop.f32.mrf.mxu0
    %v912 = vadd.f32 %v623, %v911
    %913 = vmatprep.mubr.bf16.mxu0 0
    %914 = vmatmul.mubr.bf16.gmra.mxu0 %v777
    %v915 = vpop.f32.mrf.mxu0
    %v916 = vadd.f32 %v628, %v915
    %v917 = vpop.f32.mrf.mxu0
    %v918 = vadd.f32 %v628, %v917
    %v919 = vpop.f32.mrf.mxu0
    %v920 = vadd.f32 %v633, %v919
    %v921 = vpop.f32.mrf.mxu0
    %v922 = vadd.f32 %v633, %v921
    %923 = vmatprep.mubr.bf16.mxu0 0
    %924 = vmatmul.mubr.bf16.gmra.mxu0 %v778
    %v925 = vpop.f32.mrf.mxu0
    %v926 = vadd.f32 %v638, %v925
    %v927 = vpop.f32.mrf.mxu0
    %v928 = vadd.f32 %v638, %v927
    %v929 = vpop.f32.mrf.mxu0
    %v930 = vadd.f32 %v643, %v929
    %v931 = vpop.f32.mrf.mxu0
    %v932 = vadd.f32 %v643, %v931
    %933 = vmatprep.mubr.bf16.mxu0 0
    %934 = vmatmul.mubr.bf16.gmra.mxu0 %v779
    %v935 = vpop.f32.mrf.mxu0
    %v936 = vadd.f32 %v648, %v935
    %v937 = vpop.f32.mrf.mxu0
    %v938 = vadd.f32 %v648, %v937
    %v939 = vpop.f32.mrf.mxu0
    %v940 = vadd.f32 %v653, %v939
    %v941 = vpop.f32.mrf.mxu0
    %v942 = vadd.f32 %v653, %v941
    %943 = vmatprep.mubr.bf16.mxu0 0
    %944 = vmatmul.mubr.bf16.gmra.mxu0 %v780
    %v945 = vpop.f32.mrf.mxu0
    %v946 = vadd.f32 %v658, %v945
    %v947 = vpop.f32.mrf.mxu0
    %v948 = vadd.f32 %v658, %v947
    %v949 = vpop.f32.mrf.mxu0
    %v950 = vadd.f32 %v663, %v949
    %v951 = vpop.f32.mrf.mxu0
    %v952 = vadd.f32 %v663, %v951
    %953 = vmatprep.mubr.bf16.mxu0 0
    %954 = vmatmul.mubr.bf16.gmra.mxu0 %v781
    %v955 = vpop.f32.mrf.mxu0
    %v956 = vadd.f32 %v668, %v955
    %v957 = vpop.f32.mrf.mxu0
    %v958 = vadd.f32 %v668, %v957
    %v959 = vpop.f32.mrf.mxu0
    %v960 = vadd.f32 %v673, %v959
    %v961 = vpop.f32.mrf.mxu0
    %v962 = vadd.f32 %v673, %v961
    %963 = vmatprep.mubr.bf16.mxu0 0
    %964 = vmatmul.mubr.bf16.gmra.mxu0 %v782
    %v965 = vpop.f32.mrf.mxu0
    %v966 = vadd.f32 %v678, %v965
    %v967 = vpop.f32.mrf.mxu0
    %v968 = vadd.f32 %v678, %v967
    %v969 = vpop.f32.mrf.mxu0
    %v970 = vadd.f32 %v683, %v969
    %v971 = vpop.f32.mrf.mxu0
    %v972 = vadd.f32 %v683, %v971
    %973 = vmatprep.mubr.bf16.mxu0 0
    %974 = vmatmul.mubr.bf16.gmra.mxu0 %v783
    %v975 = vpop.f32.mrf.mxu0
    %v976 = vadd.f32 %v688, %v975
    %v977 = vpop.f32.mrf.mxu0
    %v978 = vadd.f32 %v688, %v977
    %v979 = vpop.f32.mrf.mxu0
    %v980 = vadd.f32 %v693, %v979
    %v981 = vpop.f32.mrf.mxu0
    %v982 = vadd.f32 %v693, %v981
    %983 = vmatprep.mubr.bf16.mxu0 0
    %984 = vmatmul.mubr.bf16.gmra.mxu0 %v784
    %v985 = vpop.f32.mrf.mxu0
    %v986 = vadd.f32 %v698, %v985
    %v987 = vpop.f32.mrf.mxu0
    %v988 = vadd.f32 %v698, %v987
    %v989 = vpop.f32.mrf.mxu0
    %v990 = vadd.f32 %v703, %v989
    %v991 = vpop.f32.mrf.mxu0
    %v992 = vadd.f32 %v703, %v991
    %993 = vdwg.mxu0
    %vm994 = vcmp.gt.f32.partialorder %v836, 0.0
    %vm995 = vcmp.gt.f32.partialorder %v838, 0.0
    %vm996 = vcmp.gt.f32.partialorder %v840, 0.0
    %vm997 = vcmp.gt.f32.partialorder %v842, 0.0
    %vm998 = vcmp.gt.f32.partialorder %v846, 0.0
    %vm999 = vcmp.gt.f32.partialorder %v848, 0.0
    %vm1000 = vcmp.gt.f32.partialorder %v850, 0.0
    %vm1001 = vcmp.gt.f32.partialorder %v852, 0.0
    %vm1002 = vcmp.gt.f32.partialorder %v856, 0.0
    %vm1003 = vcmp.gt.f32.partialorder %v858, 0.0
    %vm1004 = vcmp.gt.f32.partialorder %v860, 0.0
    %vm1005 = vcmp.gt.f32.partialorder %v862, 0.0
    %vm1006 = vcmp.gt.f32.partialorder %v866, 0.0
    %vm1007 = vcmp.gt.f32.partialorder %v868, 0.0
    %vm1008 = vcmp.gt.f32.partialorder %v870, 0.0
    %vm1009 = vcmp.gt.f32.partialorder %v872, 0.0
    %vm1010 = vcmp.gt.f32.partialorder %v876, 0.0
    %vm1011 = vcmp.gt.f32.partialorder %v878, 0.0
    %vm1012 = vcmp.gt.f32.partialorder %v880, 0.0
    %vm1013 = vcmp.gt.f32.partialorder %v882, 0.0
    %vm1014 = vcmp.gt.f32.partialorder %v886, 0.0
    %vm1015 = vcmp.gt.f32.partialorder %v888, 0.0
    %vm1016 = vcmp.gt.f32.partialorder %v890, 0.0
    %vm1017 = vcmp.gt.f32.partialorder %v892, 0.0
    %vm1018 = vcmp.gt.f32.partialorder %v896, 0.0
    %vm1019 = vcmp.gt.f32.partialorder %v898, 0.0
    %vm1020 = vcmp.gt.f32.partialorder %v900, 0.0
    %vm1021 = vcmp.gt.f32.partialorder %v902, 0.0
    %vm1022 = vcmp.gt.f32.partialorder %v906, 0.0
    %vm1023 = vcmp.gt.f32.partialorder %v908, 0.0
    %vm1024 = vcmp.gt.f32.partialorder %v910, 0.0
    %vm1025 = vcmp.gt.f32.partialorder %v912, 0.0
    %vm1026 = vcmp.gt.f32.partialorder %v916, 0.0
    %vm1027 = vcmp.gt.f32.partialorder %v918, 0.0
    %vm1028 = vcmp.gt.f32.partialorder %v920, 0.0
    %vm1029 = vcmp.gt.f32.partialorder %v922, 0.0
    %vm1030 = vcmp.gt.f32.partialorder %v926, 0.0
    %vm1031 = vcmp.gt.f32.partialorder %v928, 0.0
    %vm1032 = vcmp.gt.f32.partialorder %v930, 0.0
    %vm1033 = vcmp.gt.f32.partialorder %v932, 0.0
    %vm1034 = vcmp.gt.f32.partialorder %v936, 0.0
    %vm1035 = vcmp.gt.f32.partialorder %v938, 0.0
    %vm1036 = vcmp.gt.f32.partialorder %v940, 0.0
    %vm1037 = vcmp.gt.f32.partialorder %v942, 0.0
    %vm1038 = vcmp.gt.f32.partialorder %v946, 0.0
    %vm1039 = vcmp.gt.f32.partialorder %v948, 0.0
    %vm1040 = vcmp.gt.f32.partialorder %v950, 0.0
    %vm1041 = vcmp.gt.f32.partialorder %v952, 0.0
    %vm1042 = vcmp.gt.f32.partialorder %v956, 0.0
    %vm1043 = vcmp.gt.f32.partialorder %v958, 0.0
    %vm1044 = vcmp.gt.f32.partialorder %v960, 0.0
    %vm1045 = vcmp.gt.f32.partialorder %v962, 0.0
    %vm1046 = vcmp.gt.f32.partialorder %v966, 0.0
    %vm1047 = vcmp.gt.f32.partialorder %v968, 0.0
    %vm1048 = vcmp.gt.f32.partialorder %v970, 0.0
    %vm1049 = vcmp.gt.f32.partialorder %v972, 0.0
    %vm1050 = vcmp.gt.f32.partialorder %v976, 0.0
    %vm1051 = vcmp.gt.f32.partialorder %v978, 0.0
    %vm1052 = vcmp.gt.f32.partialorder %v980, 0.0
    %vm1053 = vcmp.gt.f32.partialorder %v982, 0.0
    %vm1054 = vcmp.gt.f32.partialorder %v986, 0.0
    %vm1055 = vcmp.gt.f32.partialorder %v988, 0.0
    %vm1056 = vcmp.gt.f32.partialorder %v990, 0.0
    %vm1057 = vcmp.gt.f32.partialorder %v992, 0.0
    %v1058 = vmul.f32 %v836, 0.2
    %v1059 = vmul.f32 %v838, 0.2
    %v1060 = vmul.f32 %v840, 0.2
    %v1061 = vmul.f32 %v842, 0.2
    %v1062 = vmul.f32 %v846, 0.2
    %v1063 = vmul.f32 %v848, 0.2
    %v1064 = vmul.f32 %v850, 0.2
    %v1065 = vmul.f32 %v852, 0.2
    %v1066 = vmul.f32 %v856, 0.2
    %v1067 = vmul.f32 %v858, 0.2
    %v1068 = vmul.f32 %v860, 0.2
    %v1069 = vmul.f32 %v862, 0.2
    %v1070 = vmul.f32 %v866, 0.2
    %v1071 = vmul.f32 %v868, 0.2
    %v1072 = vmul.f32 %v870, 0.2
    %v1073 = vmul.f32 %v872, 0.2
    %v1074 = vmul.f32 %v876, 0.2
    %v1075 = vmul.f32 %v878, 0.2
    %v1076 = vmul.f32 %v880, 0.2
    %v1077 = vmul.f32 %v882, 0.2
    %v1078 = vmul.f32 %v886, 0.2
    %v1079 = vmul.f32 %v888, 0.2
    %v1080 = vmul.f32 %v890, 0.2
    %v1081 = vmul.f32 %v892, 0.2
    %v1082 = vmul.f32 %v896, 0.2
    %v1083 = vmul.f32 %v898, 0.2
    %v1084 = vmul.f32 %v900, 0.2
    %v1085 = vmul.f32 %v902, 0.2
    %v1086 = vmul.f32 %v906, 0.2
    %v1087 = vmul.f32 %v908, 0.2
    %v1088 = vmul.f32 %v910, 0.2
    %v1089 = vmul.f32 %v912, 0.2
    %v1090 = vmul.f32 %v916, 0.2
    %v1091 = vmul.f32 %v918, 0.2
    %v1092 = vmul.f32 %v920, 0.2
    %v1093 = vmul.f32 %v922, 0.2
    %v1094 = vmul.f32 %v926, 0.2
    %v1095 = vmul.f32 %v928, 0.2
    %v1096 = vmul.f32 %v930, 0.2
    %v1097 = vmul.f32 %v932, 0.2
    %v1098 = vmul.f32 %v936, 0.2
    %v1099 = vmul.f32 %v938, 0.2
    %v1100 = vmul.f32 %v940, 0.2
    %v1101 = vmul.f32 %v942, 0.2
    %v1102 = vmul.f32 %v946, 0.2
    %v1103 = vmul.f32 %v948, 0.2
    %v1104 = vmul.f32 %v950, 0.2
    %v1105 = vmul.f32 %v952, 0.2
    %v1106 = vmul.f32 %v956, 0.2
    %v1107 = vmul.f32 %v958, 0.2
    %v1108 = vmul.f32 %v960, 0.2
    %v1109 = vmul.f32 %v962, 0.2
    %v1110 = vmul.f32 %v966, 0.2
    %v1111 = vmul.f32 %v968, 0.2
    %v1112 = vmul.f32 %v970, 0.2
    %v1113 = vmul.f32 %v972, 0.2
    %v1114 = vmul.f32 %v976, 0.2
    %v1115 = vmul.f32 %v978, 0.2
    %v1116 = vmul.f32 %v980, 0.2
    %v1117 = vmul.f32 %v982, 0.2
    %v1118 = vmul.f32 %v986, 0.2
    %v1119 = vmul.f32 %v988, 0.2
    %v1120 = vmul.f32 %v990, 0.2
    %v1121 = vmul.f32 %v992, 0.2
    %v1122 = vsel %vm994, %v836, %v1058
    %v1123 = vsel %vm995, %v838, %v1059
    %v1124 = vsel %vm996, %v840, %v1060
    %v1125 = vsel %vm997, %v842, %v1061
    %v1126 = vsel %vm998, %v846, %v1062
    %v1127 = vsel %vm999, %v848, %v1063
    %v1128 = vsel %vm1000, %v850, %v1064
    %v1129 = vsel %vm1001, %v852, %v1065
    %v1130 = vsel %vm1002, %v856, %v1066
    %v1131 = vsel %vm1003, %v858, %v1067
    %v1132 = vsel %vm1004, %v860, %v1068
    %v1133 = vsel %vm1005, %v862, %v1069
    %v1134 = vsel %vm1006, %v866, %v1070
    %v1135 = vsel %vm1007, %v868, %v1071
    %v1136 = vsel %vm1008, %v870, %v1072
    %v1137 = vsel %vm1009, %v872, %v1073
    %v1138 = vsel %vm1010, %v876, %v1074
    %v1139 = vsel %vm1011, %v878, %v1075
    %v1140 = vsel %vm1012, %v880, %v1076
    %v1141 = vsel %vm1013, %v882, %v1077
    %v1142 = vsel %vm1014, %v886, %v1078
    %v1143 = vsel %vm1015, %v888, %v1079
    %v1144 = vsel %vm1016, %v890, %v1080
    %v1145 = vsel %vm1017, %v892, %v1081
    %v1146 = vsel %vm1018, %v896, %v1082
    %v1147 = vsel %vm1019, %v898, %v1083
    %v1148 = vsel %vm1020, %v900, %v1084
    %v1149 = vsel %vm1021, %v902, %v1085
    %v1150 = vsel %vm1022, %v906, %v1086
    %v1151 = vsel %vm1023, %v908, %v1087
    %v1152 = vsel %vm1024, %v910, %v1088
    %v1153 = vsel %vm1025, %v912, %v1089
    %v1154 = vsel %vm1026, %v916, %v1090
    %v1155 = vsel %vm1027, %v918, %v1091
    %v1156 = vsel %vm1028, %v920, %v1092
    %v1157 = vsel %vm1029, %v922, %v1093
    %v1158 = vsel %vm1030, %v926, %v1094
    %v1159 = vsel %vm1031, %v928, %v1095
    %v1160 = vsel %vm1032, %v930, %v1096
    %v1161 = vsel %vm1033, %v932, %v1097
    %v1162 = vsel %vm1034, %v936, %v1098
    %v1163 = vsel %vm1035, %v938, %v1099
    %v1164 = vsel %vm1036, %v940, %v1100
    %v1165 = vsel %vm1037, %v942, %v1101
    %v1166 = vsel %vm1038, %v946, %v1102
    %v1167 = vsel %vm1039, %v948, %v1103
    %v1168 = vsel %vm1040, %v950, %v1104
    %v1169 = vsel %vm1041, %v952, %v1105
    %v1170 = vsel %vm1042, %v956, %v1106
    %v1171 = vsel %vm1043, %v958, %v1107
    %v1172 = vsel %vm1044, %v960, %v1108
    %v1173 = vsel %vm1045, %v962, %v1109
    %v1174 = vsel %vm1046, %v966, %v1110
    %v1175 = vsel %vm1047, %v968, %v1111
    %v1176 = vsel %vm1048, %v970, %v1112
    %v1177 = vsel %vm1049, %v972, %v1113
    %v1178 = vsel %vm1050, %v976, %v1114
    %v1179 = vsel %vm1051, %v978, %v1115
    %v1180 = vsel %vm1052, %v980, %v1116
    %v1181 = vsel %vm1053, %v982, %v1117
    %v1182 = vsel %vm1054, %v986, %v1118
    %v1183 = vsel %vm1055, %v988, %v1119
    %v1184 = vsel %vm1056, %v990, %v1120
    %v1185 = vsel %vm1057, %v992, %v1121
    %v1186 = vpack.c.bf16 %v1124, %v1122
    %v1187 = vpack.c.bf16 %v1125, %v1123
    %v1188 = vpack.c.bf16 %v1128, %v1126
    %v1189 = vpack.c.bf16 %v1129, %v1127
    %v1190 = vpack.c.bf16 %v1132, %v1130
    %v1191 = vpack.c.bf16 %v1133, %v1131
    %v1192 = vpack.c.bf16 %v1136, %v1134
    %v1193 = vpack.c.bf16 %v1137, %v1135
    %v1194 = vpack.c.bf16 %v1140, %v1138
    %v1195 = vpack.c.bf16 %v1141, %v1139
    %v1196 = vpack.c.bf16 %v1144, %v1142
    %v1197 = vpack.c.bf16 %v1145, %v1143
    %v1198 = vpack.c.bf16 %v1148, %v1146
    %v1199 = vpack.c.bf16 %v1149, %v1147
    %v1200 = vpack.c.bf16 %v1152, %v1150
    %v1201 = vpack.c.bf16 %v1153, %v1151
    %v1202 = vpack.c.bf16 %v1156, %v1154
    %v1203 = vpack.c.bf16 %v1157, %v1155
    %v1204 = vpack.c.bf16 %v1160, %v1158
    %v1205 = vpack.c.bf16 %v1161, %v1159
    %v1206 = vpack.c.bf16 %v1164, %v1162
    %v1207 = vpack.c.bf16 %v1165, %v1163
    %v1208 = vpack.c.bf16 %v1168, %v1166
    %v1209 = vpack.c.bf16 %v1169, %v1167
    %v1210 = vpack.c.bf16 %v1172, %v1170
    %v1211 = vpack.c.bf16 %v1173, %v1171
    %v1212 = vpack.c.bf16 %v1176, %v1174
    %v1213 = vpack.c.bf16 %v1177, %v1175
    %v1214 = vpack.c.bf16 %v1180, %v1178
    %v1215 = vpack.c.bf16 %v1181, %v1179
    %v1216 = vpack.c.bf16 %v1184, %v1182
    %v1217 = vpack.c.bf16 %v1185, %v1183
    %v1218 = vld [vmem:[%s5] sm:$0xff]
    %v1219 = vld [vmem:[%s5 + $0x8] sm:$0xff]
    %v1220 = vld [vmem:[%s5 + $0x10] sm:$0xff]
    %v1221 = vld [vmem:[%s5 + $0x18] sm:$0xff]
    %v1222 = vld [vmem:[%s5 + $0x20] sm:$0xff]
    %v1223 = vld [vmem:[%s5 + $0x28] sm:$0xff]
    %v1224 = vld [vmem:[%s5 + $0x30] sm:$0xff]
    %v1225 = vld [vmem:[%s5 + $0x38] sm:$0xff]
    %v1226 = vld [vmem:[%s5 + $0x40] sm:$0xff]
    %v1227 = vld [vmem:[%s5 + $0x48] sm:$0xff]
    %v1228 = vld [vmem:[%s5 + $0x50] sm:$0xff]
    %v1229 = vld [vmem:[%s5 + $0x58] sm:$0xff]
    %v1230 = vld [vmem:[%s5 + $0x60] sm:$0xff]
    %v1231 = vld [vmem:[%s5 + $0x68] sm:$0xff]
    %v1232 = vld [vmem:[%s5 + $0x70] sm:$0xff]
    %v1233 = vld [vmem:[%s5 + $0x78] sm:$0xff]
    %v1234 = vld [vmem:[%s5 + $0x80] sm:$0xff]
    %v1235 = vld [vmem:[%s5 + $0x88] sm:$0xff]
    %v1236 = vld [vmem:[%s5 + $0x90] sm:$0xff]
    %v1237 = vld [vmem:[%s5 + $0x98] sm:$0xff]
    %v1238 = vld [vmem:[%s5 + $0xa0] sm:$0xff]
    %v1239 = vld [vmem:[%s5 + $0xa8] sm:$0xff]
    %v1240 = vld [vmem:[%s5 + $0xb0] sm:$0xff]
    %v1241 = vld [vmem:[%s5 + $0xb8] sm:$0xff]
    %v1242 = vld [vmem:[%s5 + $0xc0] sm:$0xff]
    %v1243 = vld [vmem:[%s5 + $0xc8] sm:$0xff]
    %v1244 = vld [vmem:[%s5 + $0xd0] sm:$0xff]
    %v1245 = vld [vmem:[%s5 + $0xd8] sm:$0xff]
    %v1246 = vld [vmem:[%s5 + $0xe0] sm:$0xff]
    %v1247 = vld [vmem:[%s5 + $0xe8] sm:$0xff]
    %v1248 = vld [vmem:[%s5 + $0xf0] sm:$0xff]
    %v1249 = vld [vmem:[%s5 + $0xf8] sm:$0xff]
    %v1250 = vld [vmem:[%s5 + $0x100] sm:$0xff]
    %v1251 = vld [vmem:[%s5 + $0x108] sm:$0xff]
    %v1252 = vld [vmem:[%s5 + $0x110] sm:$0xff]
    %v1253 = vld [vmem:[%s5 + $0x118] sm:$0xff]
    %v1254 = vld [vmem:[%s5 + $0x120] sm:$0xff]
    %v1255 = vld [vmem:[%s5 + $0x128] sm:$0xff]
    %v1256 = vld [vmem:[%s5 + $0x130] sm:$0xff]
    %v1257 = vld [vmem:[%s5 + $0x138] sm:$0xff]
    %v1258 = vld [vmem:[%s5 + $0x140] sm:$0xff]
    %v1259 = vld [vmem:[%s5 + $0x148] sm:$0xff]
    %v1260 = vld [vmem:[%s5 + $0x150] sm:$0xff]
    %v1261 = vld [vmem:[%s5 + $0x158] sm:$0xff]
    %v1262 = vld [vmem:[%s5 + $0x160] sm:$0xff]
    %v1263 = vld [vmem:[%s5 + $0x168] sm:$0xff]
    %v1264 = vld [vmem:[%s5 + $0x170] sm:$0xff]
    %v1265 = vld [vmem:[%s5 + $0x178] sm:$0xff]
    %v1266 = vld [vmem:[%s5 + $0x180] sm:$0xff]
    %v1267 = vld [vmem:[%s5 + $0x188] sm:$0xff]
    %v1268 = vld [vmem:[%s5 + $0x190] sm:$0xff]
    %v1269 = vld [vmem:[%s5 + $0x198] sm:$0xff]
    %v1270 = vld [vmem:[%s5 + $0x1a0] sm:$0xff]
    %v1271 = vld [vmem:[%s5 + $0x1a8] sm:$0xff]
    %v1272 = vld [vmem:[%s5 + $0x1b0] sm:$0xff]
    %v1273 = vld [vmem:[%s5 + $0x1b8] sm:$0xff]
    %v1274 = vld [vmem:[%s5 + $0x1c0] sm:$0xff]
    %v1275 = vld [vmem:[%s5 + $0x1c8] sm:$0xff]
    %v1276 = vld [vmem:[%s5 + $0x1d0] sm:$0xff]
    %v1277 = vld [vmem:[%s5 + $0x1d8] sm:$0xff]
    %v1278 = vld [vmem:[%s5 + $0x1e0] sm:$0xff]
    %v1279 = vld [vmem:[%s5 + $0x1e8] sm:$0xff]
    %v1280 = vld [vmem:[%s5 + $0x1f0] sm:$0xff]
    %v1281 = vld [vmem:[%s5 + $0x1f8] sm:$0xff]
    %v1282 = vld [vmem:[%s6] sm:$0xff]
    %v1283 = vld [vmem:[%s6 + $0x8] sm:$0xff]
    %v1284 = vld [vmem:[%s6 + $0x10] sm:$0xff]
    %v1285 = vld [vmem:[%s6 + $0x18] sm:$0xff]
    %v1286 = vld [vmem:[%s6 + $0x20] sm:$0xff]
    %v1287 = vld [vmem:[%s6 + $0x28] sm:$0xff]
    %v1288 = vld [vmem:[%s6 + $0x30] sm:$0xff]
    %v1289 = vld [vmem:[%s6 + $0x38] sm:$0xff]
    %v1290 = vld [vmem:[%s6 + $0x40] sm:$0xff]
    %v1291 = vld [vmem:[%s6 + $0x48] sm:$0xff]
    %v1292 = vld [vmem:[%s6 + $0x50] sm:$0xff]
    %v1293 = vld [vmem:[%s6 + $0x58] sm:$0xff]
    %v1294 = vld [vmem:[%s6 + $0x60] sm:$0xff]
    %v1295 = vld [vmem:[%s6 + $0x68] sm:$0xff]
    %v1296 = vld [vmem:[%s6 + $0x70] sm:$0xff]
    %v1297 = vld [vmem:[%s6 + $0x78] sm:$0xff]
    %v1298 = vld [vmem:[%s6 + $0x80] sm:$0xff]
    %v1299 = vld [vmem:[%s6 + $0x88] sm:$0xff]
    %v1300 = vld [vmem:[%s6 + $0x90] sm:$0xff]
    %v1301 = vld [vmem:[%s6 + $0x98] sm:$0xff]
    %v1302 = vld [vmem:[%s6 + $0xa0] sm:$0xff]
    %v1303 = vld [vmem:[%s6 + $0xa8] sm:$0xff]
    %v1304 = vld [vmem:[%s6 + $0xb0] sm:$0xff]
    %v1305 = vld [vmem:[%s6 + $0xb8] sm:$0xff]
    %v1306 = vld [vmem:[%s6 + $0xc0] sm:$0xff]
    %v1307 = vld [vmem:[%s6 + $0xc8] sm:$0xff]
    %v1308 = vld [vmem:[%s6 + $0xd0] sm:$0xff]
    %v1309 = vld [vmem:[%s6 + $0xd8] sm:$0xff]
    %v1310 = vld [vmem:[%s6 + $0xe0] sm:$0xff]
    %v1311 = vld [vmem:[%s6 + $0xe8] sm:$0xff]
    %v1312 = vld [vmem:[%s6 + $0xf0] sm:$0xff]
    %v1313 = vld [vmem:[%s6 + $0xf8] sm:$0xff]
    %v1314 = vld [vmem:[%s6 + $0x100] sm:$0xff]
    %v1315 = vld [vmem:[%s6 + $0x108] sm:$0xff]
    %v1316 = vld [vmem:[%s6 + $0x110] sm:$0xff]
    %v1317 = vld [vmem:[%s6 + $0x118] sm:$0xff]
    %v1318 = vld [vmem:[%s6 + $0x120] sm:$0xff]
    %v1319 = vld [vmem:[%s6 + $0x128] sm:$0xff]
    %v1320 = vld [vmem:[%s6 + $0x130] sm:$0xff]
    %v1321 = vld [vmem:[%s6 + $0x138] sm:$0xff]
    %v1322 = vld [vmem:[%s6 + $0x140] sm:$0xff]
    %v1323 = vld [vmem:[%s6 + $0x148] sm:$0xff]
    %v1324 = vld [vmem:[%s6 + $0x150] sm:$0xff]
    %v1325 = vld [vmem:[%s6 + $0x158] sm:$0xff]
    %v1326 = vld [vmem:[%s6 + $0x160] sm:$0xff]
    %v1327 = vld [vmem:[%s6 + $0x168] sm:$0xff]
    %v1328 = vld [vmem:[%s6 + $0x170] sm:$0xff]
    %v1329 = vld [vmem:[%s6 + $0x178] sm:$0xff]
    %v1330 = vld [vmem:[%s6 + $0x180] sm:$0xff]
    %v1331 = vld [vmem:[%s6 + $0x188] sm:$0xff]
    %v1332 = vld [vmem:[%s6 + $0x190] sm:$0xff]
    %v1333 = vld [vmem:[%s6 + $0x198] sm:$0xff]
    %v1334 = vld [vmem:[%s6 + $0x1a0] sm:$0xff]
    %v1335 = vld [vmem:[%s6 + $0x1a8] sm:$0xff]
    %v1336 = vld [vmem:[%s6 + $0x1b0] sm:$0xff]
    %v1337 = vld [vmem:[%s6 + $0x1b8] sm:$0xff]
    %v1338 = vld [vmem:[%s6 + $0x1c0] sm:$0xff]
    %v1339 = vld [vmem:[%s6 + $0x1c8] sm:$0xff]
    %v1340 = vld [vmem:[%s6 + $0x1d0] sm:$0xff]
    %v1341 = vld [vmem:[%s6 + $0x1d8] sm:$0xff]
    %v1342 = vld [vmem:[%s6 + $0x1e0] sm:$0xff]
    %v1343 = vld [vmem:[%s6 + $0x1e8] sm:$0xff]
    %v1344 = vld [vmem:[%s6 + $0x1f0] sm:$0xff]
    %v1345 = vld [vmem:[%s6 + $0x1f8] sm:$0xff]
    %1347 = vset.pattern.permute.xlu0 0
    %1348 = vperm.xlu0 %1347, %v1282
    %v1349 = vpop.permute.xlu0 %1348
    %1352 = vset.pattern.permute.xlu0 0
    %1353 = vperm.xlu0 %1352, %v1283
    %v1354 = vpop.permute.xlu0 %1353
    %1357 = vset.pattern.permute.xlu0 0
    %1358 = vperm.xlu0 %1357, %v1284
    %v1359 = vpop.permute.xlu0 %1358
    %1362 = vset.pattern.permute.xlu0 0
    %1363 = vperm.xlu0 %1362, %v1285
    %v1364 = vpop.permute.xlu0 %1363
    %1367 = vset.pattern.permute.xlu0 0
    %1368 = vperm.xlu0 %1367, %v1286
    %v1369 = vpop.permute.xlu0 %1368
    %1372 = vset.pattern.permute.xlu0 0
    %1373 = vperm.xlu0 %1372, %v1287
    %v1374 = vpop.permute.xlu0 %1373
    %1377 = vset.pattern.permute.xlu0 0
    %1378 = vperm.xlu0 %1377, %v1288
    %v1379 = vpop.permute.xlu0 %1378
    %1382 = vset.pattern.permute.xlu0 0
    %1383 = vperm.xlu0 %1382, %v1289
    %v1384 = vpop.permute.xlu0 %1383
    %1387 = vset.pattern.permute.xlu0 0
    %1388 = vperm.xlu0 %1387, %v1290
    %v1389 = vpop.permute.xlu0 %1388
    %1392 = vset.pattern.permute.xlu0 0
    %1393 = vperm.xlu0 %1392, %v1291
    %v1394 = vpop.permute.xlu0 %1393
    %1397 = vset.pattern.permute.xlu0 0
    %1398 = vperm.xlu0 %1397, %v1292
    %v1399 = vpop.permute.xlu0 %1398
    %1402 = vset.pattern.permute.xlu0 0
    %1403 = vperm.xlu0 %1402, %v1293
    %v1404 = vpop.permute.xlu0 %1403
    %1407 = vset.pattern.permute.xlu0 0
    %1408 = vperm.xlu0 %1407, %v1294
    %v1409 = vpop.permute.xlu0 %1408
    %1412 = vset.pattern.permute.xlu0 0
    %1413 = vperm.xlu0 %1412, %v1295
    %v1414 = vpop.permute.xlu0 %1413
    %1417 = vset.pattern.permute.xlu0 0
    %1418 = vperm.xlu0 %1417, %v1296
    %v1419 = vpop.permute.xlu0 %1418
    %1422 = vset.pattern.permute.xlu0 0
    %1423 = vperm.xlu0 %1422, %v1297
    %v1424 = vpop.permute.xlu0 %1423
    %1427 = vset.pattern.permute.xlu0 0
    %1428 = vperm.xlu0 %1427, %v1298
    %v1429 = vpop.permute.xlu0 %1428
    %1432 = vset.pattern.permute.xlu0 0
    %1433 = vperm.xlu0 %1432, %v1299
    %v1434 = vpop.permute.xlu0 %1433
    %1437 = vset.pattern.permute.xlu0 0
    %1438 = vperm.xlu0 %1437, %v1300
    %v1439 = vpop.permute.xlu0 %1438
    %1442 = vset.pattern.permute.xlu0 0
    %1443 = vperm.xlu0 %1442, %v1301
    %v1444 = vpop.permute.xlu0 %1443
    %1447 = vset.pattern.permute.xlu0 0
    %1448 = vperm.xlu0 %1447, %v1302
    %v1449 = vpop.permute.xlu0 %1448
    %1452 = vset.pattern.permute.xlu0 0
    %1453 = vperm.xlu0 %1452, %v1303
    %v1454 = vpop.permute.xlu0 %1453
    %1457 = vset.pattern.permute.xlu0 0
    %1458 = vperm.xlu0 %1457, %v1304
    %v1459 = vpop.permute.xlu0 %1458
    %1462 = vset.pattern.permute.xlu0 0
    %1463 = vperm.xlu0 %1462, %v1305
    %v1464 = vpop.permute.xlu0 %1463
    %1467 = vset.pattern.permute.xlu0 0
    %1468 = vperm.xlu0 %1467, %v1306
    %v1469 = vpop.permute.xlu0 %1468
    %1472 = vset.pattern.permute.xlu0 0
    %1473 = vperm.xlu0 %1472, %v1307
    %v1474 = vpop.permute.xlu0 %1473
    %1477 = vset.pattern.permute.xlu0 0
    %1478 = vperm.xlu0 %1477, %v1308
    %v1479 = vpop.permute.xlu0 %1478
    %1482 = vset.pattern.permute.xlu0 0
    %1483 = vperm.xlu0 %1482, %v1309
    %v1484 = vpop.permute.xlu0 %1483
    %1487 = vset.pattern.permute.xlu0 0
    %1488 = vperm.xlu0 %1487, %v1310
    %v1489 = vpop.permute.xlu0 %1488
    %1492 = vset.pattern.permute.xlu0 0
    %1493 = vperm.xlu0 %1492, %v1311
    %v1494 = vpop.permute.xlu0 %1493
    %1497 = vset.pattern.permute.xlu0 0
    %1498 = vperm.xlu0 %1497, %v1312
    %v1499 = vpop.permute.xlu0 %1498
    %1502 = vset.pattern.permute.xlu0 0
    %1503 = vperm.xlu0 %1502, %v1313
    %v1504 = vpop.permute.xlu0 %1503
    %1507 = vset.pattern.permute.xlu0 0
    %1508 = vperm.xlu0 %1507, %v1314
    %v1509 = vpop.permute.xlu0 %1508
    %1512 = vset.pattern.permute.xlu0 0
    %1513 = vperm.xlu0 %1512, %v1315
    %v1514 = vpop.permute.xlu0 %1513
    %1517 = vset.pattern.permute.xlu0 0
    %1518 = vperm.xlu0 %1517, %v1316
    %v1519 = vpop.permute.xlu0 %1518
    %1522 = vset.pattern.permute.xlu0 0
    %1523 = vperm.xlu0 %1522, %v1317
    %v1524 = vpop.permute.xlu0 %1523
    %1527 = vset.pattern.permute.xlu0 0
    %1528 = vperm.xlu0 %1527, %v1318
    %v1529 = vpop.permute.xlu0 %1528
    %1532 = vset.pattern.permute.xlu0 0
    %1533 = vperm.xlu0 %1532, %v1319
    %v1534 = vpop.permute.xlu0 %1533
    %1537 = vset.pattern.permute.xlu0 0
    %1538 = vperm.xlu0 %1537, %v1320
    %v1539 = vpop.permute.xlu0 %1538
    %1542 = vset.pattern.permute.xlu0 0
    %1543 = vperm.xlu0 %1542, %v1321
    %v1544 = vpop.permute.xlu0 %1543
    %1547 = vset.pattern.permute.xlu0 0
    %1548 = vperm.xlu0 %1547, %v1322
    %v1549 = vpop.permute.xlu0 %1548
    %1552 = vset.pattern.permute.xlu0 0
    %1553 = vperm.xlu0 %1552, %v1323
    %v1554 = vpop.permute.xlu0 %1553
    %1557 = vset.pattern.permute.xlu0 0
    %1558 = vperm.xlu0 %1557, %v1324
    %v1559 = vpop.permute.xlu0 %1558
    %1562 = vset.pattern.permute.xlu0 0
    %1563 = vperm.xlu0 %1562, %v1325
    %v1564 = vpop.permute.xlu0 %1563
    %1567 = vset.pattern.permute.xlu0 0
    %1568 = vperm.xlu0 %1567, %v1326
    %v1569 = vpop.permute.xlu0 %1568
    %1572 = vset.pattern.permute.xlu0 0
    %1573 = vperm.xlu0 %1572, %v1327
    %v1574 = vpop.permute.xlu0 %1573
    %1577 = vset.pattern.permute.xlu0 0
    %1578 = vperm.xlu0 %1577, %v1328
    %v1579 = vpop.permute.xlu0 %1578
    %1582 = vset.pattern.permute.xlu0 0
    %1583 = vperm.xlu0 %1582, %v1329
    %v1584 = vpop.permute.xlu0 %1583
    %1587 = vset.pattern.permute.xlu0 0
    %1588 = vperm.xlu0 %1587, %v1330
    %v1589 = vpop.permute.xlu0 %1588
    %1592 = vset.pattern.permute.xlu0 0
    %1593 = vperm.xlu0 %1592, %v1331
    %v1594 = vpop.permute.xlu0 %1593
    %1597 = vset.pattern.permute.xlu0 0
    %1598 = vperm.xlu0 %1597, %v1332
    %v1599 = vpop.permute.xlu0 %1598
    %1602 = vset.pattern.permute.xlu0 0
    %1603 = vperm.xlu0 %1602, %v1333
    %v1604 = vpop.permute.xlu0 %1603
    %1607 = vset.pattern.permute.xlu0 0
    %1608 = vperm.xlu0 %1607, %v1334
    %v1609 = vpop.permute.xlu0 %1608
    %1612 = vset.pattern.permute.xlu0 0
    %1613 = vperm.xlu0 %1612, %v1335
    %v1614 = vpop.permute.xlu0 %1613
    %1617 = vset.pattern.permute.xlu0 0
    %1618 = vperm.xlu0 %1617, %v1336
    %v1619 = vpop.permute.xlu0 %1618
    %1622 = vset.pattern.permute.xlu0 0
    %1623 = vperm.xlu0 %1622, %v1337
    %v1624 = vpop.permute.xlu0 %1623
    %1627 = vset.pattern.permute.xlu0 0
    %1628 = vperm.xlu0 %1627, %v1338
    %v1629 = vpop.permute.xlu0 %1628
    %1632 = vset.pattern.permute.xlu0 0
    %1633 = vperm.xlu0 %1632, %v1339
    %v1634 = vpop.permute.xlu0 %1633
    %1637 = vset.pattern.permute.xlu0 0
    %1638 = vperm.xlu0 %1637, %v1340
    %v1639 = vpop.permute.xlu0 %1638
    %1642 = vset.pattern.permute.xlu0 0
    %1643 = vperm.xlu0 %1642, %v1341
    %v1644 = vpop.permute.xlu0 %1643
    %1647 = vset.pattern.permute.xlu0 0
    %1648 = vperm.xlu0 %1647, %v1342
    %v1649 = vpop.permute.xlu0 %1648
    %1652 = vset.pattern.permute.xlu0 0
    %1653 = vperm.xlu0 %1652, %v1343
    %v1654 = vpop.permute.xlu0 %1653
    %1657 = vset.pattern.permute.xlu0 0
    %1658 = vperm.xlu0 %1657, %v1344
    %v1659 = vpop.permute.xlu0 %1658
    %1662 = vset.pattern.permute.xlu0 0
    %1663 = vperm.xlu0 %1662, %v1345
    %v1664 = vpop.permute.xlu0 %1663
    %v1730 = vunpack.c.l.b16 %v1218
    %v1731 = vunpack.c.h.b16 %v1218
    %v1732 = vunpack.c.l.b16 %v1219
    %v1733 = vunpack.c.h.b16 %v1219
    %v1734 = vunpack.c.l.b16 %v1220
    %v1735 = vunpack.c.h.b16 %v1220
    %v1736 = vunpack.c.l.b16 %v1221
    %v1737 = vunpack.c.h.b16 %v1221
    %v1738 = vunpack.c.l.b16 %v1222
    %v1739 = vunpack.c.h.b16 %v1222
    %v1740 = vunpack.c.l.b16 %v1223
    %v1741 = vunpack.c.h.b16 %v1223
    %v1742 = vunpack.c.l.b16 %v1224
    %v1743 = vunpack.c.h.b16 %v1224
    %v1744 = vunpack.c.l.b16 %v1225
    %v1745 = vunpack.c.h.b16 %v1225
    %v1746 = vunpack.c.l.b16 %v1226
    %v1747 = vunpack.c.h.b16 %v1226
    %v1748 = vunpack.c.l.b16 %v1227
    %v1749 = vunpack.c.h.b16 %v1227
    %v1750 = vunpack.c.l.b16 %v1228
    %v1751 = vunpack.c.h.b16 %v1228
    %v1752 = vunpack.c.l.b16 %v1229
    %v1753 = vunpack.c.h.b16 %v1229
    %v1754 = vunpack.c.l.b16 %v1230
    %v1755 = vunpack.c.h.b16 %v1230
    %v1756 = vunpack.c.l.b16 %v1231
    %v1757 = vunpack.c.h.b16 %v1231
    %v1758 = vunpack.c.l.b16 %v1232
    %v1759 = vunpack.c.h.b16 %v1232
    %v1760 = vunpack.c.l.b16 %v1233
    %v1761 = vunpack.c.h.b16 %v1233
    %v1762 = vunpack.c.l.b16 %v1234
    %v1763 = vunpack.c.h.b16 %v1234
    %v1764 = vunpack.c.l.b16 %v1235
    %v1765 = vunpack.c.h.b16 %v1235
    %v1766 = vunpack.c.l.b16 %v1236
    %v1767 = vunpack.c.h.b16 %v1236
    %v1768 = vunpack.c.l.b16 %v1237
    %v1769 = vunpack.c.h.b16 %v1237
    %v1770 = vunpack.c.l.b16 %v1238
    %v1771 = vunpack.c.h.b16 %v1238
    %v1772 = vunpack.c.l.b16 %v1239
    %v1773 = vunpack.c.h.b16 %v1239
    %v1774 = vunpack.c.l.b16 %v1240
    %v1775 = vunpack.c.h.b16 %v1240
    %v1776 = vunpack.c.l.b16 %v1241
    %v1777 = vunpack.c.h.b16 %v1241
    %v1778 = vunpack.c.l.b16 %v1242
    %v1779 = vunpack.c.h.b16 %v1242
    %v1780 = vunpack.c.l.b16 %v1243
    %v1781 = vunpack.c.h.b16 %v1243
    %v1782 = vunpack.c.l.b16 %v1244
    %v1783 = vunpack.c.h.b16 %v1244
    %v1784 = vunpack.c.l.b16 %v1245
    %v1785 = vunpack.c.h.b16 %v1245
    %v1786 = vunpack.c.l.b16 %v1246
    %v1787 = vunpack.c.h.b16 %v1246
    %v1788 = vunpack.c.l.b16 %v1247
    %v1789 = vunpack.c.h.b16 %v1247
    %v1790 = vunpack.c.l.b16 %v1248
    %v1791 = vunpack.c.h.b16 %v1248
    %v1792 = vunpack.c.l.b16 %v1249
    %v1793 = vunpack.c.h.b16 %v1249
    %v1794 = vunpack.c.l.b16 %v1250
    %v1795 = vunpack.c.h.b16 %v1250
    %v1796 = vunpack.c.l.b16 %v1251
    %v1797 = vunpack.c.h.b16 %v1251
    %v1798 = vunpack.c.l.b16 %v1252
    %v1799 = vunpack.c.h.b16 %v1252
    %v1800 = vunpack.c.l.b16 %v1253
    %v1801 = vunpack.c.h.b16 %v1253
    %v1802 = vunpack.c.l.b16 %v1254
    %v1803 = vunpack.c.h.b16 %v1254
    %v1804 = vunpack.c.l.b16 %v1255
    %v1805 = vunpack.c.h.b16 %v1255
    %v1806 = vunpack.c.l.b16 %v1256
    %v1807 = vunpack.c.h.b16 %v1256
    %v1808 = vunpack.c.l.b16 %v1257
    %v1809 = vunpack.c.h.b16 %v1257
    %v1810 = vunpack.c.l.b16 %v1258
    %v1811 = vunpack.c.h.b16 %v1258
    %v1812 = vunpack.c.l.b16 %v1259
    %v1813 = vunpack.c.h.b16 %v1259
    %v1814 = vunpack.c.l.b16 %v1260
    %v1815 = vunpack.c.h.b16 %v1260
    %v1816 = vunpack.c.l.b16 %v1261
    %v1817 = vunpack.c.h.b16 %v1261
    %v1818 = vunpack.c.l.b16 %v1262
    %v1819 = vunpack.c.h.b16 %v1262
    %v1820 = vunpack.c.l.b16 %v1263
    %v1821 = vunpack.c.h.b16 %v1263
    %v1822 = vunpack.c.l.b16 %v1264
    %v1823 = vunpack.c.h.b16 %v1264
    %v1824 = vunpack.c.l.b16 %v1265
    %v1825 = vunpack.c.h.b16 %v1265
    %v1826 = vunpack.c.l.b16 %v1266
    %v1827 = vunpack.c.h.b16 %v1266
    %v1828 = vunpack.c.l.b16 %v1267
    %v1829 = vunpack.c.h.b16 %v1267
    %v1830 = vunpack.c.l.b16 %v1268
    %v1831 = vunpack.c.h.b16 %v1268
    %v1832 = vunpack.c.l.b16 %v1269
    %v1833 = vunpack.c.h.b16 %v1269
    %v1834 = vunpack.c.l.b16 %v1270
    %v1835 = vunpack.c.h.b16 %v1270
    %v1836 = vunpack.c.l.b16 %v1271
    %v1837 = vunpack.c.h.b16 %v1271
    %v1838 = vunpack.c.l.b16 %v1272
    %v1839 = vunpack.c.h.b16 %v1272
    %v1840 = vunpack.c.l.b16 %v1273
    %v1841 = vunpack.c.h.b16 %v1273
    %v1842 = vunpack.c.l.b16 %v1274
    %v1843 = vunpack.c.h.b16 %v1274
    %v1844 = vunpack.c.l.b16 %v1275
    %v1845 = vunpack.c.h.b16 %v1275
    %v1846 = vunpack.c.l.b16 %v1276
    %v1847 = vunpack.c.h.b16 %v1276
    %v1848 = vunpack.c.l.b16 %v1277
    %v1849 = vunpack.c.h.b16 %v1277
    %v1850 = vunpack.c.l.b16 %v1278
    %v1851 = vunpack.c.h.b16 %v1278
    %v1852 = vunpack.c.l.b16 %v1279
    %v1853 = vunpack.c.h.b16 %v1279
    %v1854 = vunpack.c.l.b16 %v1280
    %v1855 = vunpack.c.h.b16 %v1280
    %v1856 = vunpack.c.l.b16 %v1281
    %v1857 = vunpack.c.h.b16 %v1281
    %v1858 = vpack.c.b16 %v1732, %v1730
    %v1859 = vpack.c.b16 %v1733, %v1731
    %v1860 = vpack.c.b16 %v1736, %v1734
    %v1861 = vpack.c.b16 %v1737, %v1735
    %v1862 = vpack.c.b16 %v1740, %v1738
    %v1863 = vpack.c.b16 %v1741, %v1739
    %v1864 = vpack.c.b16 %v1744, %v1742
    %v1865 = vpack.c.b16 %v1745, %v1743
    %v1866 = vpack.c.b16 %v1748, %v1746
    %v1867 = vpack.c.b16 %v1749, %v1747
    %v1868 = vpack.c.b16 %v1752, %v1750
    %v1869 = vpack.c.b16 %v1753, %v1751
    %v1870 = vpack.c.b16 %v1756, %v1754
    %v1871 = vpack.c.b16 %v1757, %v1755
    %v1872 = vpack.c.b16 %v1760, %v1758
    %v1873 = vpack.c.b16 %v1761, %v1759
    %v1874 = vpack.c.b16 %v1764, %v1762
    %v1875 = vpack.c.b16 %v1765, %v1763
    %v1876 = vpack.c.b16 %v1768, %v1766
    %v1877 = vpack.c.b16 %v1769, %v1767
    %v1878 = vpack.c.b16 %v1772, %v1770
    %v1879 = vpack.c.b16 %v1773, %v1771
    %v1880 = vpack.c.b16 %v1776, %v1774
    %v1881 = vpack.c.b16 %v1777, %v1775
    %v1882 = vpack.c.b16 %v1780, %v1778
    %v1883 = vpack.c.b16 %v1781, %v1779
    %v1884 = vpack.c.b16 %v1784, %v1782
    %v1885 = vpack.c.b16 %v1785, %v1783
    %v1886 = vpack.c.b16 %v1788, %v1786
    %v1887 = vpack.c.b16 %v1789, %v1787
    %v1888 = vpack.c.b16 %v1792, %v1790
    %v1889 = vpack.c.b16 %v1793, %v1791
    %v1890 = vpack.c.b16 %v1796, %v1794
    %v1891 = vpack.c.b16 %v1797, %v1795
    %v1892 = vpack.c.b16 %v1800, %v1798
    %v1893 = vpack.c.b16 %v1801, %v1799
    %v1894 = vpack.c.b16 %v1804, %v1802
    %v1895 = vpack.c.b16 %v1805, %v1803
    %v1896 = vpack.c.b16 %v1808, %v1806
    %v1897 = vpack.c.b16 %v1809, %v1807
    %v1898 = vpack.c.b16 %v1812, %v1810
    %v1899 = vpack.c.b16 %v1813, %v1811
    %v1900 = vpack.c.b16 %v1816, %v1814
    %v1901 = vpack.c.b16 %v1817, %v1815
    %v1902 = vpack.c.b16 %v1820, %v1818
    %v1903 = vpack.c.b16 %v1821, %v1819
    %v1904 = vpack.c.b16 %v1824, %v1822
    %v1905 = vpack.c.b16 %v1825, %v1823
    %v1906 = vpack.c.b16 %v1828, %v1826
    %v1907 = vpack.c.b16 %v1829, %v1827
    %v1908 = vpack.c.b16 %v1832, %v1830
    %v1909 = vpack.c.b16 %v1833, %v1831
    %v1910 = vpack.c.b16 %v1836, %v1834
    %v1911 = vpack.c.b16 %v1837, %v1835
    %v1912 = vpack.c.b16 %v1840, %v1838
    %v1913 = vpack.c.b16 %v1841, %v1839
    %v1914 = vpack.c.b16 %v1844, %v1842
    %v1915 = vpack.c.b16 %v1845, %v1843
    %v1916 = vpack.c.b16 %v1848, %v1846
    %v1917 = vpack.c.b16 %v1849, %v1847
    %v1918 = vpack.c.b16 %v1852, %v1850
    %v1919 = vpack.c.b16 %v1853, %v1851
    %v1920 = vpack.c.b16 %v1856, %v1854
    %v1921 = vpack.c.b16 %v1857, %v1855
    %1986 = vmatprep.subr.bf16.mxu0 %v1201
    %1987 = vmatpush1.bf16.msra.mxu0 %v1200
    %1988 = vmatprep.subr.bf16.mxu0 %v1199
    %1989 = vmatpush1.bf16.msra.mxu0 %v1198
    %1990 = vmatprep.subr.bf16.mxu0 %v1197
    %1991 = vmatpush1.bf16.msra.mxu0 %v1196
    %1992 = vmatprep.subr.bf16.mxu0 %v1195
    %1993 = vmatpush1.bf16.msra.mxu0 %v1194
    %1994 = vmatprep.subr.bf16.mxu0 %v1193
    %1995 = vmatpush1.bf16.msra.mxu0 %v1192
    %1996 = vmatprep.subr.bf16.mxu0 %v1191
    %1997 = vmatpush1.bf16.msra.mxu0 %v1190
    %1998 = vmatprep.subr.bf16.mxu0 %v1189
    %1999 = vmatpush1.bf16.msra.mxu0 %v1188
    %2000 = vmatprep.subr.bf16.mxu0 %v1187
    %2001 = vmatpush1.bf16.msra.mxu0 %v1186
    %2002 = vmatprep.subr.bf16.mxu0 %v1217
    %2003 = vmatpush2.bf16.msra.mxu0 %v1216
    %2004 = vmatprep.subr.bf16.mxu0 %v1215
    %2005 = vmatpush2.bf16.msra.mxu0 %v1214
    %2006 = vmatprep.subr.bf16.mxu0 %v1213
    %2007 = vmatpush2.bf16.msra.mxu0 %v1212
    %2008 = vmatprep.subr.bf16.mxu0 %v1211
    %2009 = vmatpush2.bf16.msra.mxu0 %v1210
    %2010 = vmatprep.subr.bf16.mxu0 %v1209
    %2011 = vmatpush2.bf16.msra.mxu0 %v1208
    %2012 = vmatprep.subr.bf16.mxu0 %v1207
    %2013 = vmatpush2.bf16.msra.mxu0 %v1206
    %2014 = vmatprep.subr.bf16.mxu0 %v1205
    %2015 = vmatpush2.bf16.msra.mxu0 %v1204
    %2016 = vmatprep.subr.bf16.mxu0 %v1203
    %2017 = vmatpush2.bf16.msra.mxu0 %v1202
    %2018 = vmatprep.mubr.bf16.mxu0 %v1859
    %2019 = vmatmul.mubr.bf16.gmra.mxu0 %v1858
    %v2020 = vpop.f32.mrf.mxu0
    %v2021 = vadd.f32 %v1349, %v2020
    %v2022 = vpop.f32.mrf.mxu0
    %v2023 = vadd.f32 %v1349, %v2022
    %v2024 = vpop.f32.mrf.mxu0
    %v2025 = vadd.f32 %v1354, %v2024
    %v2026 = vpop.f32.mrf.mxu0
    %v2027 = vadd.f32 %v1354, %v2026
    %2028 = vmatprep.mubr.bf16.mxu0 %v1861
    %2029 = vmatmul.mubr.bf16.gmra.mxu0 %v1860
    %v2030 = vpop.f32.mrf.mxu0
    %v2031 = vadd.f32 %v1359, %v2030
    %v2032 = vpop.f32.mrf.mxu0
    %v2033 = vadd.f32 %v1359, %v2032
    %v2034 = vpop.f32.mrf.mxu0
    %v2035 = vadd.f32 %v1364, %v2034
    %v2036 = vpop.f32.mrf.mxu0
    %v2037 = vadd.f32 %v1364, %v2036
    %2038 = vmatprep.mubr.bf16.mxu0 %v1863
    %2039 = vmatmul.mubr.bf16.gmra.mxu0 %v1862
    %v2040 = vpop.f32.mrf.mxu0
    %v2041 = vadd.f32 %v1369, %v2040
    %v2042 = vpop.f32.mrf.mxu0
    %v2043 = vadd.f32 %v1369, %v2042
    %v2044 = vpop.f32.mrf.mxu0
    %v2045 = vadd.f32 %v1374, %v2044
    %v2046 = vpop.f32.mrf.mxu0
    %v2047 = vadd.f32 %v1374, %v2046
    %2048 = vmatprep.mubr.bf16.mxu0 %v1865
    %2049 = vmatmul.mubr.bf16.gmra.mxu0 %v1864
    %v2050 = vpop.f32.mrf.mxu0
    %v2051 = vadd.f32 %v1379, %v2050
    %v2052 = vpop.f32.mrf.mxu0
    %v2053 = vadd.f32 %v1379, %v2052
    %v2054 = vpop.f32.mrf.mxu0
    %v2055 = vadd.f32 %v1384, %v2054
    %v2056 = vpop.f32.mrf.mxu0
    %v2057 = vadd.f32 %v1384, %v2056
    %2058 = vmatprep.mubr.bf16.mxu0 %v1867
    %2059 = vmatmul.mubr.bf16.gmra.mxu0 %v1866
    %v2060 = vpop.f32.mrf.mxu0
    %v2061 = vadd.f32 %v1389, %v2060
    %v2062 = vpop.f32.mrf.mxu0
    %v2063 = vadd.f32 %v1389, %v2062
    %v2064 = vpop.f32.mrf.mxu0
    %v2065 = vadd.f32 %v1394, %v2064
    %v2066 = vpop.f32.mrf.mxu0
    %v2067 = vadd.f32 %v1394, %v2066
    %2068 = vmatprep.mubr.bf16.mxu0 %v1869
    %2069 = vmatmul.mubr.bf16.gmra.mxu0 %v1868
    %v2070 = vpop.f32.mrf.mxu0
    %v2071 = vadd.f32 %v1399, %v2070
    %v2072 = vpop.f32.mrf.mxu0
    %v2073 = vadd.f32 %v1399, %v2072
    %v2074 = vpop.f32.mrf.mxu0
    %v2075 = vadd.f32 %v1404, %v2074
    %v2076 = vpop.f32.mrf.mxu0
    %v2077 = vadd.f32 %v1404, %v2076
    %2078 = vmatprep.mubr.bf16.mxu0 %v1871
    %2079 = vmatmul.mubr.bf16.gmra.mxu0 %v1870
    %v2080 = vpop.f32.mrf.mxu0
    %v2081 = vadd.f32 %v1409, %v2080
    %v2082 = vpop.f32.mrf.mxu0
    %v2083 = vadd.f32 %v1409, %v2082
    %v2084 = vpop.f32.mrf.mxu0
    %v2085 = vadd.f32 %v1414, %v2084
    %v2086 = vpop.f32.mrf.mxu0
    %v2087 = vadd.f32 %v1414, %v2086
    %2088 = vmatprep.mubr.bf16.mxu0 %v1873
    %2089 = vmatmul.mubr.bf16.gmra.mxu0 %v1872
    %v2090 = vpop.f32.mrf.mxu0
    %v2091 = vadd.f32 %v1419, %v2090
    %v2092 = vpop.f32.mrf.mxu0
    %v2093 = vadd.f32 %v1419, %v2092
    %v2094 = vpop.f32.mrf.mxu0
    %v2095 = vadd.f32 %v1424, %v2094
    %v2096 = vpop.f32.mrf.mxu0
    %v2097 = vadd.f32 %v1424, %v2096
    %2098 = vmatprep.mubr.bf16.mxu0 %v1875
    %2099 = vmatmul.mubr.bf16.gmra.mxu0 %v1874
    %v2100 = vpop.f32.mrf.mxu0
    %v2101 = vadd.f32 %v1429, %v2100
    %v2102 = vpop.f32.mrf.mxu0
    %v2103 = vadd.f32 %v1429, %v2102
    %v2104 = vpop.f32.mrf.mxu0
    %v2105 = vadd.f32 %v1434, %v2104
    %v2106 = vpop.f32.mrf.mxu0
    %v2107 = vadd.f32 %v1434, %v2106
    %2108 = vmatprep.mubr.bf16.mxu0 %v1877
    %2109 = vmatmul.mubr.bf16.gmra.mxu0 %v1876
    %v2110 = vpop.f32.mrf.mxu0
    %v2111 = vadd.f32 %v1439, %v2110
    %v2112 = vpop.f32.mrf.mxu0
    %v2113 = vadd.f32 %v1439, %v2112
    %v2114 = vpop.f32.mrf.mxu0
    %v2115 = vadd.f32 %v1444, %v2114
    %v2116 = vpop.f32.mrf.mxu0
    %v2117 = vadd.f32 %v1444, %v2116
    %2118 = vmatprep.mubr.bf16.mxu0 %v1879
    %2119 = vmatmul.mubr.bf16.gmra.mxu0 %v1878
    %v2120 = vpop.f32.mrf.mxu0
    %v2121 = vadd.f32 %v1449, %v2120
    %v2122 = vpop.f32.mrf.mxu0
    %v2123 = vadd.f32 %v1449, %v2122
    %v2124 = vpop.f32.mrf.mxu0
    %v2125 = vadd.f32 %v1454, %v2124
    %v2126 = vpop.f32.mrf.mxu0
    %v2127 = vadd.f32 %v1454, %v2126
    %2128 = vmatprep.mubr.bf16.mxu0 %v1881
    %2129 = vmatmul.mubr.bf16.gmra.mxu0 %v1880
    %v2130 = vpop.f32.mrf.mxu0
    %v2131 = vadd.f32 %v1459, %v2130
    %v2132 = vpop.f32.mrf.mxu0
    %v2133 = vadd.f32 %v1459, %v2132
    %v2134 = vpop.f32.mrf.mxu0
    %v2135 = vadd.f32 %v1464, %v2134
    %v2136 = vpop.f32.mrf.mxu0
    %v2137 = vadd.f32 %v1464, %v2136
    %2138 = vmatprep.mubr.bf16.mxu0 %v1883
    %2139 = vmatmul.mubr.bf16.gmra.mxu0 %v1882
    %v2140 = vpop.f32.mrf.mxu0
    %v2141 = vadd.f32 %v1469, %v2140
    %v2142 = vpop.f32.mrf.mxu0
    %v2143 = vadd.f32 %v1469, %v2142
    %v2144 = vpop.f32.mrf.mxu0
    %v2145 = vadd.f32 %v1474, %v2144
    %v2146 = vpop.f32.mrf.mxu0
    %v2147 = vadd.f32 %v1474, %v2146
    %2148 = vmatprep.mubr.bf16.mxu0 %v1885
    %2149 = vmatmul.mubr.bf16.gmra.mxu0 %v1884
    %v2150 = vpop.f32.mrf.mxu0
    %v2151 = vadd.f32 %v1479, %v2150
    %v2152 = vpop.f32.mrf.mxu0
    %v2153 = vadd.f32 %v1479, %v2152
    %v2154 = vpop.f32.mrf.mxu0
    %v2155 = vadd.f32 %v1484, %v2154
    %v2156 = vpop.f32.mrf.mxu0
    %v2157 = vadd.f32 %v1484, %v2156
    %2158 = vmatprep.mubr.bf16.mxu0 %v1887
    %2159 = vmatmul.mubr.bf16.gmra.mxu0 %v1886
    %v2160 = vpop.f32.mrf.mxu0
    %v2161 = vadd.f32 %v1489, %v2160
    %v2162 = vpop.f32.mrf.mxu0
    %v2163 = vadd.f32 %v1489, %v2162
    %v2164 = vpop.f32.mrf.mxu0
    %v2165 = vadd.f32 %v1494, %v2164
    %v2166 = vpop.f32.mrf.mxu0
    %v2167 = vadd.f32 %v1494, %v2166
    %2168 = vmatprep.mubr.bf16.mxu0 %v1889
    %2169 = vmatmul.mubr.bf16.gmra.mxu0 %v1888
    %v2170 = vpop.f32.mrf.mxu0
    %v2171 = vadd.f32 %v1499, %v2170
    %v2172 = vpop.f32.mrf.mxu0
    %v2173 = vadd.f32 %v1499, %v2172
    %v2174 = vpop.f32.mrf.mxu0
    %v2175 = vadd.f32 %v1504, %v2174
    %v2176 = vpop.f32.mrf.mxu0
    %v2177 = vadd.f32 %v1504, %v2176
    %2178 = vmatprep.mubr.bf16.mxu0 %v1891
    %2179 = vmatmul.mubr.bf16.gmra.mxu0 %v1890
    %v2180 = vpop.f32.mrf.mxu0
    %v2181 = vadd.f32 %v1509, %v2180
    %v2182 = vpop.f32.mrf.mxu0
    %v2183 = vadd.f32 %v1509, %v2182
    %v2184 = vpop.f32.mrf.mxu0
    %v2185 = vadd.f32 %v1514, %v2184
    %v2186 = vpop.f32.mrf.mxu0
    %v2187 = vadd.f32 %v1514, %v2186
    %2188 = vmatprep.mubr.bf16.mxu0 %v1893
    %2189 = vmatmul.mubr.bf16.gmra.mxu0 %v1892
    %v2190 = vpop.f32.mrf.mxu0
    %v2191 = vadd.f32 %v1519, %v2190
    %v2192 = vpop.f32.mrf.mxu0
    %v2193 = vadd.f32 %v1519, %v2192
    %v2194 = vpop.f32.mrf.mxu0
    %v2195 = vadd.f32 %v1524, %v2194
    %v2196 = vpop.f32.mrf.mxu0
    %v2197 = vadd.f32 %v1524, %v2196
    %2198 = vmatprep.mubr.bf16.mxu0 %v1895
    %2199 = vmatmul.mubr.bf16.gmra.mxu0 %v1894
    %v2200 = vpop.f32.mrf.mxu0
    %v2201 = vadd.f32 %v1529, %v2200
    %v2202 = vpop.f32.mrf.mxu0
    %v2203 = vadd.f32 %v1529, %v2202
    %v2204 = vpop.f32.mrf.mxu0
    %v2205 = vadd.f32 %v1534, %v2204
    %v2206 = vpop.f32.mrf.mxu0
    %v2207 = vadd.f32 %v1534, %v2206
    %2208 = vmatprep.mubr.bf16.mxu0 %v1897
    %2209 = vmatmul.mubr.bf16.gmra.mxu0 %v1896
    %v2210 = vpop.f32.mrf.mxu0
    %v2211 = vadd.f32 %v1539, %v2210
    %v2212 = vpop.f32.mrf.mxu0
    %v2213 = vadd.f32 %v1539, %v2212
    %v2214 = vpop.f32.mrf.mxu0
    %v2215 = vadd.f32 %v1544, %v2214
    %v2216 = vpop.f32.mrf.mxu0
    %v2217 = vadd.f32 %v1544, %v2216
    %2218 = vmatprep.mubr.bf16.mxu0 %v1899
    %2219 = vmatmul.mubr.bf16.gmra.mxu0 %v1898
    %v2220 = vpop.f32.mrf.mxu0
    %v2221 = vadd.f32 %v1549, %v2220
    %v2222 = vpop.f32.mrf.mxu0
    %v2223 = vadd.f32 %v1549, %v2222
    %v2224 = vpop.f32.mrf.mxu0
    %v2225 = vadd.f32 %v1554, %v2224
    %v2226 = vpop.f32.mrf.mxu0
    %v2227 = vadd.f32 %v1554, %v2226
    %2228 = vmatprep.mubr.bf16.mxu0 %v1901
    %2229 = vmatmul.mubr.bf16.gmra.mxu0 %v1900
    %v2230 = vpop.f32.mrf.mxu0
    %v2231 = vadd.f32 %v1559, %v2230
    %v2232 = vpop.f32.mrf.mxu0
    %v2233 = vadd.f32 %v1559, %v2232
    %v2234 = vpop.f32.mrf.mxu0
    %v2235 = vadd.f32 %v1564, %v2234
    %v2236 = vpop.f32.mrf.mxu0
    %v2237 = vadd.f32 %v1564, %v2236
    %2238 = vmatprep.mubr.bf16.mxu0 %v1903
    %2239 = vmatmul.mubr.bf16.gmra.mxu0 %v1902
    %v2240 = vpop.f32.mrf.mxu0
    %v2241 = vadd.f32 %v1569, %v2240
    %v2242 = vpop.f32.mrf.mxu0
    %v2243 = vadd.f32 %v1569, %v2242
    %v2244 = vpop.f32.mrf.mxu0
    %v2245 = vadd.f32 %v1574, %v2244
    %v2246 = vpop.f32.mrf.mxu0
    %v2247 = vadd.f32 %v1574, %v2246
    %2248 = vmatprep.mubr.bf16.mxu0 %v1905
    %2249 = vmatmul.mubr.bf16.gmra.mxu0 %v1904
    %v2250 = vpop.f32.mrf.mxu0
    %v2251 = vadd.f32 %v1579, %v2250
    %v2252 = vpop.f32.mrf.mxu0
    %v2253 = vadd.f32 %v1579, %v2252
    %v2254 = vpop.f32.mrf.mxu0
    %v2255 = vadd.f32 %v1584, %v2254
    %v2256 = vpop.f32.mrf.mxu0
    %v2257 = vadd.f32 %v1584, %v2256
    %2258 = vmatprep.mubr.bf16.mxu0 %v1907
    %2259 = vmatmul.mubr.bf16.gmra.mxu0 %v1906
    %v2260 = vpop.f32.mrf.mxu0
    %v2261 = vadd.f32 %v1589, %v2260
    %v2262 = vpop.f32.mrf.mxu0
    %v2263 = vadd.f32 %v1589, %v2262
    %v2264 = vpop.f32.mrf.mxu0
    %v2265 = vadd.f32 %v1594, %v2264
    %v2266 = vpop.f32.mrf.mxu0
    %v2267 = vadd.f32 %v1594, %v2266
    %2268 = vmatprep.mubr.bf16.mxu0 %v1909
    %2269 = vmatmul.mubr.bf16.gmra.mxu0 %v1908
    %v2270 = vpop.f32.mrf.mxu0
    %v2271 = vadd.f32 %v1599, %v2270
    %v2272 = vpop.f32.mrf.mxu0
    %v2273 = vadd.f32 %v1599, %v2272
    %v2274 = vpop.f32.mrf.mxu0
    %v2275 = vadd.f32 %v1604, %v2274
    %v2276 = vpop.f32.mrf.mxu0
    %v2277 = vadd.f32 %v1604, %v2276
    %2278 = vmatprep.mubr.bf16.mxu0 %v1911
    %2279 = vmatmul.mubr.bf16.gmra.mxu0 %v1910
    %v2280 = vpop.f32.mrf.mxu0
    %v2281 = vadd.f32 %v1609, %v2280
    %v2282 = vpop.f32.mrf.mxu0
    %v2283 = vadd.f32 %v1609, %v2282
    %v2284 = vpop.f32.mrf.mxu0
    %v2285 = vadd.f32 %v1614, %v2284
    %v2286 = vpop.f32.mrf.mxu0
    %v2287 = vadd.f32 %v1614, %v2286
    %2288 = vmatprep.mubr.bf16.mxu0 %v1913
    %2289 = vmatmul.mubr.bf16.gmra.mxu0 %v1912
    %v2290 = vpop.f32.mrf.mxu0
    %v2291 = vadd.f32 %v1619, %v2290
    %v2292 = vpop.f32.mrf.mxu0
    %v2293 = vadd.f32 %v1619, %v2292
    %v2294 = vpop.f32.mrf.mxu0
    %v2295 = vadd.f32 %v1624, %v2294
    %v2296 = vpop.f32.mrf.mxu0
    %v2297 = vadd.f32 %v1624, %v2296
    %2298 = vmatprep.mubr.bf16.mxu0 %v1915
    %2299 = vmatmul.mubr.bf16.gmra.mxu0 %v1914
    %v2300 = vpop.f32.mrf.mxu0
    %v2301 = vadd.f32 %v1629, %v2300
    %v2302 = vpop.f32.mrf.mxu0
    %v2303 = vadd.f32 %v1629, %v2302
    %v2304 = vpop.f32.mrf.mxu0
    %v2305 = vadd.f32 %v1634, %v2304
    %v2306 = vpop.f32.mrf.mxu0
    %v2307 = vadd.f32 %v1634, %v2306
    %2308 = vmatprep.mubr.bf16.mxu0 %v1917
    %2309 = vmatmul.mubr.bf16.gmra.mxu0 %v1916
    %v2310 = vpop.f32.mrf.mxu0
    %v2311 = vadd.f32 %v1639, %v2310
    %v2312 = vpop.f32.mrf.mxu0
    %v2313 = vadd.f32 %v1639, %v2312
    %v2314 = vpop.f32.mrf.mxu0
    %v2315 = vadd.f32 %v1644, %v2314
    %v2316 = vpop.f32.mrf.mxu0
    %v2317 = vadd.f32 %v1644, %v2316
    %2318 = vmatprep.mubr.bf16.mxu0 %v1919
    %2319 = vmatmul.mubr.bf16.gmra.mxu0 %v1918
    %v2320 = vpop.f32.mrf.mxu0
    %v2321 = vadd.f32 %v1649, %v2320
    %v2322 = vpop.f32.mrf.mxu0
    %v2323 = vadd.f32 %v1649, %v2322
    %v2324 = vpop.f32.mrf.mxu0
    %v2325 = vadd.f32 %v1654, %v2324
    %v2326 = vpop.f32.mrf.mxu0
    %v2327 = vadd.f32 %v1654, %v2326
    %2328 = vmatprep.mubr.bf16.mxu0 %v1921
    %2329 = vmatmul.mubr.bf16.gmra.mxu0 %v1920
    %v2330 = vpop.f32.mrf.mxu0
    %v2331 = vadd.f32 %v1659, %v2330
    %v2332 = vpop.f32.mrf.mxu0
    %v2333 = vadd.f32 %v1659, %v2332
    %v2334 = vpop.f32.mrf.mxu0
    %v2335 = vadd.f32 %v1664, %v2334
    %v2336 = vpop.f32.mrf.mxu0
    %v2337 = vadd.f32 %v1664, %v2336
    %2338 = vdwg.mxu0
    %vm2339 = vcmp.gt.f32.partialorder %v2021, 0.0
    %vm2340 = vcmp.gt.f32.partialorder %v2023, 0.0
    %vm2341 = vcmp.gt.f32.partialorder %v2025, 0.0
    %vm2342 = vcmp.gt.f32.partialorder %v2027, 0.0
    %vm2343 = vcmp.gt.f32.partialorder %v2031, 0.0
    %vm2344 = vcmp.gt.f32.partialorder %v2033, 0.0
    %vm2345 = vcmp.gt.f32.partialorder %v2035, 0.0
    %vm2346 = vcmp.gt.f32.partialorder %v2037, 0.0
    %vm2347 = vcmp.gt.f32.partialorder %v2041, 0.0
    %vm2348 = vcmp.gt.f32.partialorder %v2043, 0.0
    %vm2349 = vcmp.gt.f32.partialorder %v2045, 0.0
    %vm2350 = vcmp.gt.f32.partialorder %v2047, 0.0
    %vm2351 = vcmp.gt.f32.partialorder %v2051, 0.0
    %vm2352 = vcmp.gt.f32.partialorder %v2053, 0.0
    %vm2353 = vcmp.gt.f32.partialorder %v2055, 0.0
    %vm2354 = vcmp.gt.f32.partialorder %v2057, 0.0
    %vm2355 = vcmp.gt.f32.partialorder %v2061, 0.0
    %vm2356 = vcmp.gt.f32.partialorder %v2063, 0.0
    %vm2357 = vcmp.gt.f32.partialorder %v2065, 0.0
    %vm2358 = vcmp.gt.f32.partialorder %v2067, 0.0
    %vm2359 = vcmp.gt.f32.partialorder %v2071, 0.0
    %vm2360 = vcmp.gt.f32.partialorder %v2073, 0.0
    %vm2361 = vcmp.gt.f32.partialorder %v2075, 0.0
    %vm2362 = vcmp.gt.f32.partialorder %v2077, 0.0
    %vm2363 = vcmp.gt.f32.partialorder %v2081, 0.0
    %vm2364 = vcmp.gt.f32.partialorder %v2083, 0.0
    %vm2365 = vcmp.gt.f32.partialorder %v2085, 0.0
    %vm2366 = vcmp.gt.f32.partialorder %v2087, 0.0
    %vm2367 = vcmp.gt.f32.partialorder %v2091, 0.0
    %vm2368 = vcmp.gt.f32.partialorder %v2093, 0.0
    %vm2369 = vcmp.gt.f32.partialorder %v2095, 0.0
    %vm2370 = vcmp.gt.f32.partialorder %v2097, 0.0
    %vm2371 = vcmp.gt.f32.partialorder %v2101, 0.0
    %vm2372 = vcmp.gt.f32.partialorder %v2103, 0.0
    %vm2373 = vcmp.gt.f32.partialorder %v2105, 0.0
    %vm2374 = vcmp.gt.f32.partialorder %v2107, 0.0
    %vm2375 = vcmp.gt.f32.partialorder %v2111, 0.0
    %vm2376 = vcmp.gt.f32.partialorder %v2113, 0.0
    %vm2377 = vcmp.gt.f32.partialorder %v2115, 0.0
    %vm2378 = vcmp.gt.f32.partialorder %v2117, 0.0
    %vm2379 = vcmp.gt.f32.partialorder %v2121, 0.0
    %vm2380 = vcmp.gt.f32.partialorder %v2123, 0.0
    %vm2381 = vcmp.gt.f32.partialorder %v2125, 0.0
    %vm2382 = vcmp.gt.f32.partialorder %v2127, 0.0
    %vm2383 = vcmp.gt.f32.partialorder %v2131, 0.0
    %vm2384 = vcmp.gt.f32.partialorder %v2133, 0.0
    %vm2385 = vcmp.gt.f32.partialorder %v2135, 0.0
    %vm2386 = vcmp.gt.f32.partialorder %v2137, 0.0
    %vm2387 = vcmp.gt.f32.partialorder %v2141, 0.0
    %vm2388 = vcmp.gt.f32.partialorder %v2143, 0.0
    %vm2389 = vcmp.gt.f32.partialorder %v2145, 0.0
    %vm2390 = vcmp.gt.f32.partialorder %v2147, 0.0
    %vm2391 = vcmp.gt.f32.partialorder %v2151, 0.0
    %vm2392 = vcmp.gt.f32.partialorder %v2153, 0.0
    %vm2393 = vcmp.gt.f32.partialorder %v2155, 0.0
    %vm2394 = vcmp.gt.f32.partialorder %v2157, 0.0
    %vm2395 = vcmp.gt.f32.partialorder %v2161, 0.0
    %vm2396 = vcmp.gt.f32.partialorder %v2163, 0.0
    %vm2397 = vcmp.gt.f32.partialorder %v2165, 0.0
    %vm2398 = vcmp.gt.f32.partialorder %v2167, 0.0
    %vm2399 = vcmp.gt.f32.partialorder %v2171, 0.0
    %vm2400 = vcmp.gt.f32.partialorder %v2173, 0.0
    %vm2401 = vcmp.gt.f32.partialorder %v2175, 0.0
    %vm2402 = vcmp.gt.f32.partialorder %v2177, 0.0
    %vm2403 = vcmp.gt.f32.partialorder %v2181, 0.0
    %vm2404 = vcmp.gt.f32.partialorder %v2183, 0.0
    %vm2405 = vcmp.gt.f32.partialorder %v2185, 0.0
    %vm2406 = vcmp.gt.f32.partialorder %v2187, 0.0
    %vm2407 = vcmp.gt.f32.partialorder %v2191, 0.0
    %vm2408 = vcmp.gt.f32.partialorder %v2193, 0.0
    %vm2409 = vcmp.gt.f32.partialorder %v2195, 0.0
    %vm2410 = vcmp.gt.f32.partialorder %v2197, 0.0
    %vm2411 = vcmp.gt.f32.partialorder %v2201, 0.0
    %vm2412 = vcmp.gt.f32.partialorder %v2203, 0.0
    %vm2413 = vcmp.gt.f32.partialorder %v2205, 0.0
    %vm2414 = vcmp.gt.f32.partialorder %v2207, 0.0
    %vm2415 = vcmp.gt.f32.partialorder %v2211, 0.0
    %vm2416 = vcmp.gt.f32.partialorder %v2213, 0.0
    %vm2417 = vcmp.gt.f32.partialorder %v2215, 0.0
    %vm2418 = vcmp.gt.f32.partialorder %v2217, 0.0
    %vm2419 = vcmp.gt.f32.partialorder %v2221, 0.0
    %vm2420 = vcmp.gt.f32.partialorder %v2223, 0.0
    %vm2421 = vcmp.gt.f32.partialorder %v2225, 0.0
    %vm2422 = vcmp.gt.f32.partialorder %v2227, 0.0
    %vm2423 = vcmp.gt.f32.partialorder %v2231, 0.0
    %vm2424 = vcmp.gt.f32.partialorder %v2233, 0.0
    %vm2425 = vcmp.gt.f32.partialorder %v2235, 0.0
    %vm2426 = vcmp.gt.f32.partialorder %v2237, 0.0
    %vm2427 = vcmp.gt.f32.partialorder %v2241, 0.0
    %vm2428 = vcmp.gt.f32.partialorder %v2243, 0.0
    %vm2429 = vcmp.gt.f32.partialorder %v2245, 0.0
    %vm2430 = vcmp.gt.f32.partialorder %v2247, 0.0
    %vm2431 = vcmp.gt.f32.partialorder %v2251, 0.0
    %vm2432 = vcmp.gt.f32.partialorder %v2253, 0.0
    %vm2433 = vcmp.gt.f32.partialorder %v2255, 0.0
    %vm2434 = vcmp.gt.f32.partialorder %v2257, 0.0
    %vm2435 = vcmp.gt.f32.partialorder %v2261, 0.0
    %vm2436 = vcmp.gt.f32.partialorder %v2263, 0.0
    %vm2437 = vcmp.gt.f32.partialorder %v2265, 0.0
    %vm2438 = vcmp.gt.f32.partialorder %v2267, 0.0
    %vm2439 = vcmp.gt.f32.partialorder %v2271, 0.0
    %vm2440 = vcmp.gt.f32.partialorder %v2273, 0.0
    %vm2441 = vcmp.gt.f32.partialorder %v2275, 0.0
    %vm2442 = vcmp.gt.f32.partialorder %v2277, 0.0
    %vm2443 = vcmp.gt.f32.partialorder %v2281, 0.0
    %vm2444 = vcmp.gt.f32.partialorder %v2283, 0.0
    %vm2445 = vcmp.gt.f32.partialorder %v2285, 0.0
    %vm2446 = vcmp.gt.f32.partialorder %v2287, 0.0
    %vm2447 = vcmp.gt.f32.partialorder %v2291, 0.0
    %vm2448 = vcmp.gt.f32.partialorder %v2293, 0.0
    %vm2449 = vcmp.gt.f32.partialorder %v2295, 0.0
    %vm2450 = vcmp.gt.f32.partialorder %v2297, 0.0
    %vm2451 = vcmp.gt.f32.partialorder %v2301, 0.0
    %vm2452 = vcmp.gt.f32.partialorder %v2303, 0.0
    %vm2453 = vcmp.gt.f32.partialorder %v2305, 0.0
    %vm2454 = vcmp.gt.f32.partialorder %v2307, 0.0
    %vm2455 = vcmp.gt.f32.partialorder %v2311, 0.0
    %vm2456 = vcmp.gt.f32.partialorder %v2313, 0.0
    %vm2457 = vcmp.gt.f32.partialorder %v2315, 0.0
    %vm2458 = vcmp.gt.f32.partialorder %v2317, 0.0
    %vm2459 = vcmp.gt.f32.partialorder %v2321, 0.0
    %vm2460 = vcmp.gt.f32.partialorder %v2323, 0.0
    %vm2461 = vcmp.gt.f32.partialorder %v2325, 0.0
    %vm2462 = vcmp.gt.f32.partialorder %v2327, 0.0
    %vm2463 = vcmp.gt.f32.partialorder %v2331, 0.0
    %vm2464 = vcmp.gt.f32.partialorder %v2333, 0.0
    %vm2465 = vcmp.gt.f32.partialorder %v2335, 0.0
    %vm2466 = vcmp.gt.f32.partialorder %v2337, 0.0
    %v2467 = vmul.f32 %v2021, 0.2
    %v2468 = vmul.f32 %v2023, 0.2
    %v2469 = vmul.f32 %v2025, 0.2
    %v2470 = vmul.f32 %v2027, 0.2
    %v2471 = vmul.f32 %v2031, 0.2
    %v2472 = vmul.f32 %v2033, 0.2
    %v2473 = vmul.f32 %v2035, 0.2
    %v2474 = vmul.f32 %v2037, 0.2
    %v2475 = vmul.f32 %v2041, 0.2
    %v2476 = vmul.f32 %v2043, 0.2
    %v2477 = vmul.f32 %v2045, 0.2
    %v2478 = vmul.f32 %v2047, 0.2
    %v2479 = vmul.f32 %v2051, 0.2
    %v2480 = vmul.f32 %v2053, 0.2
    %v2481 = vmul.f32 %v2055, 0.2
    %v2482 = vmul.f32 %v2057, 0.2
    %v2483 = vmul.f32 %v2061, 0.2
    %v2484 = vmul.f32 %v2063, 0.2
    %v2485 = vmul.f32 %v2065, 0.2
    %v2486 = vmul.f32 %v2067, 0.2
    %v2487 = vmul.f32 %v2071, 0.2
    %v2488 = vmul.f32 %v2073, 0.2
    %v2489 = vmul.f32 %v2075, 0.2
    %v2490 = vmul.f32 %v2077, 0.2
    %v2491 = vmul.f32 %v2081, 0.2
    %v2492 = vmul.f32 %v2083, 0.2
    %v2493 = vmul.f32 %v2085, 0.2
    %v2494 = vmul.f32 %v2087, 0.2
    %v2495 = vmul.f32 %v2091, 0.2
    %v2496 = vmul.f32 %v2093, 0.2
    %v2497 = vmul.f32 %v2095, 0.2
    %v2498 = vmul.f32 %v2097, 0.2
    %v2499 = vmul.f32 %v2101, 0.2
    %v2500 = vmul.f32 %v2103, 0.2
    %v2501 = vmul.f32 %v2105, 0.2
    %v2502 = vmul.f32 %v2107, 0.2
    %v2503 = vmul.f32 %v2111, 0.2
    %v2504 = vmul.f32 %v2113, 0.2
    %v2505 = vmul.f32 %v2115, 0.2
    %v2506 = vmul.f32 %v2117, 0.2
    %v2507 = vmul.f32 %v2121, 0.2
    %v2508 = vmul.f32 %v2123, 0.2
    %v2509 = vmul.f32 %v2125, 0.2
    %v2510 = vmul.f32 %v2127, 0.2
    %v2511 = vmul.f32 %v2131, 0.2
    %v2512 = vmul.f32 %v2133, 0.2
    %v2513 = vmul.f32 %v2135, 0.2
    %v2514 = vmul.f32 %v2137, 0.2
    %v2515 = vmul.f32 %v2141, 0.2
    %v2516 = vmul.f32 %v2143, 0.2
    %v2517 = vmul.f32 %v2145, 0.2
    %v2518 = vmul.f32 %v2147, 0.2
    %v2519 = vmul.f32 %v2151, 0.2
    %v2520 = vmul.f32 %v2153, 0.2
    %v2521 = vmul.f32 %v2155, 0.2
    %v2522 = vmul.f32 %v2157, 0.2
    %v2523 = vmul.f32 %v2161, 0.2
    %v2524 = vmul.f32 %v2163, 0.2
    %v2525 = vmul.f32 %v2165, 0.2
    %v2526 = vmul.f32 %v2167, 0.2
    %v2527 = vmul.f32 %v2171, 0.2
    %v2528 = vmul.f32 %v2173, 0.2
    %v2529 = vmul.f32 %v2175, 0.2
    %v2530 = vmul.f32 %v2177, 0.2
    %v2531 = vmul.f32 %v2181, 0.2
    %v2532 = vmul.f32 %v2183, 0.2
    %v2533 = vmul.f32 %v2185, 0.2
    %v2534 = vmul.f32 %v2187, 0.2
    %v2535 = vmul.f32 %v2191, 0.2
    %v2536 = vmul.f32 %v2193, 0.2
    %v2537 = vmul.f32 %v2195, 0.2
    %v2538 = vmul.f32 %v2197, 0.2
    %v2539 = vmul.f32 %v2201, 0.2
    %v2540 = vmul.f32 %v2203, 0.2
    %v2541 = vmul.f32 %v2205, 0.2
    %v2542 = vmul.f32 %v2207, 0.2
    %v2543 = vmul.f32 %v2211, 0.2
    %v2544 = vmul.f32 %v2213, 0.2
    %v2545 = vmul.f32 %v2215, 0.2
    %v2546 = vmul.f32 %v2217, 0.2
    %v2547 = vmul.f32 %v2221, 0.2
    %v2548 = vmul.f32 %v2223, 0.2
    %v2549 = vmul.f32 %v2225, 0.2
    %v2550 = vmul.f32 %v2227, 0.2
    %v2551 = vmul.f32 %v2231, 0.2
    %v2552 = vmul.f32 %v2233, 0.2
    %v2553 = vmul.f32 %v2235, 0.2
    %v2554 = vmul.f32 %v2237, 0.2
    %v2555 = vmul.f32 %v2241, 0.2
    %v2556 = vmul.f32 %v2243, 0.2
    %v2557 = vmul.f32 %v2245, 0.2
    %v2558 = vmul.f32 %v2247, 0.2
    %v2559 = vmul.f32 %v2251, 0.2
    %v2560 = vmul.f32 %v2253, 0.2
    %v2561 = vmul.f32 %v2255, 0.2
    %v2562 = vmul.f32 %v2257, 0.2
    %v2563 = vmul.f32 %v2261, 0.2
    %v2564 = vmul.f32 %v2263, 0.2
    %v2565 = vmul.f32 %v2265, 0.2
    %v2566 = vmul.f32 %v2267, 0.2
    %v2567 = vmul.f32 %v2271, 0.2
    %v2568 = vmul.f32 %v2273, 0.2
    %v2569 = vmul.f32 %v2275, 0.2
    %v2570 = vmul.f32 %v2277, 0.2
    %v2571 = vmul.f32 %v2281, 0.2
    %v2572 = vmul.f32 %v2283, 0.2
    %v2573 = vmul.f32 %v2285, 0.2
    %v2574 = vmul.f32 %v2287, 0.2
    %v2575 = vmul.f32 %v2291, 0.2
    %v2576 = vmul.f32 %v2293, 0.2
    %v2577 = vmul.f32 %v2295, 0.2
    %v2578 = vmul.f32 %v2297, 0.2
    %v2579 = vmul.f32 %v2301, 0.2
    %v2580 = vmul.f32 %v2303, 0.2
    %v2581 = vmul.f32 %v2305, 0.2
    %v2582 = vmul.f32 %v2307, 0.2
    %v2583 = vmul.f32 %v2311, 0.2
    %v2584 = vmul.f32 %v2313, 0.2
    %v2585 = vmul.f32 %v2315, 0.2
    %v2586 = vmul.f32 %v2317, 0.2
    %v2587 = vmul.f32 %v2321, 0.2
    %v2588 = vmul.f32 %v2323, 0.2
    %v2589 = vmul.f32 %v2325, 0.2
    %v2590 = vmul.f32 %v2327, 0.2
    %v2591 = vmul.f32 %v2331, 0.2
    %v2592 = vmul.f32 %v2333, 0.2
    %v2593 = vmul.f32 %v2335, 0.2
    %v2594 = vmul.f32 %v2337, 0.2
    %v2595 = vsel %vm2339, %v2021, %v2467
    %v2596 = vsel %vm2340, %v2023, %v2468
    %v2597 = vsel %vm2341, %v2025, %v2469
    %v2598 = vsel %vm2342, %v2027, %v2470
    %v2599 = vsel %vm2343, %v2031, %v2471
    %v2600 = vsel %vm2344, %v2033, %v2472
    %v2601 = vsel %vm2345, %v2035, %v2473
    %v2602 = vsel %vm2346, %v2037, %v2474
    %v2603 = vsel %vm2347, %v2041, %v2475
    %v2604 = vsel %vm2348, %v2043, %v2476
    %v2605 = vsel %vm2349, %v2045, %v2477
    %v2606 = vsel %vm2350, %v2047, %v2478
    %v2607 = vsel %vm2351, %v2051, %v2479
    %v2608 = vsel %vm2352, %v2053, %v2480
    %v2609 = vsel %vm2353, %v2055, %v2481
    %v2610 = vsel %vm2354, %v2057, %v2482
    %v2611 = vsel %vm2355, %v2061, %v2483
    %v2612 = vsel %vm2356, %v2063, %v2484
    %v2613 = vsel %vm2357, %v2065, %v2485
    %v2614 = vsel %vm2358, %v2067, %v2486
    %v2615 = vsel %vm2359, %v2071, %v2487
    %v2616 = vsel %vm2360, %v2073, %v2488
    %v2617 = vsel %vm2361, %v2075, %v2489
    %v2618 = vsel %vm2362, %v2077, %v2490
    %v2619 = vsel %vm2363, %v2081, %v2491
    %v2620 = vsel %vm2364, %v2083, %v2492
    %v2621 = vsel %vm2365, %v2085, %v2493
    %v2622 = vsel %vm2366, %v2087, %v2494
    %v2623 = vsel %vm2367, %v2091, %v2495
    %v2624 = vsel %vm2368, %v2093, %v2496
    %v2625 = vsel %vm2369, %v2095, %v2497
    %v2626 = vsel %vm2370, %v2097, %v2498
    %v2627 = vsel %vm2371, %v2101, %v2499
    %v2628 = vsel %vm2372, %v2103, %v2500
    %v2629 = vsel %vm2373, %v2105, %v2501
    %v2630 = vsel %vm2374, %v2107, %v2502
    %v2631 = vsel %vm2375, %v2111, %v2503
    %v2632 = vsel %vm2376, %v2113, %v2504
    %v2633 = vsel %vm2377, %v2115, %v2505
    %v2634 = vsel %vm2378, %v2117, %v2506
    %v2635 = vsel %vm2379, %v2121, %v2507
    %v2636 = vsel %vm2380, %v2123, %v2508
    %v2637 = vsel %vm2381, %v2125, %v2509
    %v2638 = vsel %vm2382, %v2127, %v2510
    %v2639 = vsel %vm2383, %v2131, %v2511
    %v2640 = vsel %vm2384, %v2133, %v2512
    %v2641 = vsel %vm2385, %v2135, %v2513
    %v2642 = vsel %vm2386, %v2137, %v2514
    %v2643 = vsel %vm2387, %v2141, %v2515
    %v2644 = vsel %vm2388, %v2143, %v2516
    %v2645 = vsel %vm2389, %v2145, %v2517
    %v2646 = vsel %vm2390, %v2147, %v2518
    %v2647 = vsel %vm2391, %v2151, %v2519
    %v2648 = vsel %vm2392, %v2153, %v2520
    %v2649 = vsel %vm2393, %v2155, %v2521
    %v2650 = vsel %vm2394, %v2157, %v2522
    %v2651 = vsel %vm2395, %v2161, %v2523
    %v2652 = vsel %vm2396, %v2163, %v2524
    %v2653 = vsel %vm2397, %v2165, %v2525
    %v2654 = vsel %vm2398, %v2167, %v2526
    %v2655 = vsel %vm2399, %v2171, %v2527
    %v2656 = vsel %vm2400, %v2173, %v2528
    %v2657 = vsel %vm2401, %v2175, %v2529
    %v2658 = vsel %vm2402, %v2177, %v2530
    %v2659 = vsel %vm2403, %v2181, %v2531
    %v2660 = vsel %vm2404, %v2183, %v2532
    %v2661 = vsel %vm2405, %v2185, %v2533
    %v2662 = vsel %vm2406, %v2187, %v2534
    %v2663 = vsel %vm2407, %v2191, %v2535
    %v2664 = vsel %vm2408, %v2193, %v2536
    %v2665 = vsel %vm2409, %v2195, %v2537
    %v2666 = vsel %vm2410, %v2197, %v2538
    %v2667 = vsel %vm2411, %v2201, %v2539
    %v2668 = vsel %vm2412, %v2203, %v2540
    %v2669 = vsel %vm2413, %v2205, %v2541
    %v2670 = vsel %vm2414, %v2207, %v2542
    %v2671 = vsel %vm2415, %v2211, %v2543
    %v2672 = vsel %vm2416, %v2213, %v2544
    %v2673 = vsel %vm2417, %v2215, %v2545
    %v2674 = vsel %vm2418, %v2217, %v2546
    %v2675 = vsel %vm2419, %v2221, %v2547
    %v2676 = vsel %vm2420, %v2223, %v2548
    %v2677 = vsel %vm2421, %v2225, %v2549
    %v2678 = vsel %vm2422, %v2227, %v2550
    %v2679 = vsel %vm2423, %v2231, %v2551
    %v2680 = vsel %vm2424, %v2233, %v2552
    %v2681 = vsel %vm2425, %v2235, %v2553
    %v2682 = vsel %vm2426, %v2237, %v2554
    %v2683 = vsel %vm2427, %v2241, %v2555
    %v2684 = vsel %vm2428, %v2243, %v2556
    %v2685 = vsel %vm2429, %v2245, %v2557
    %v2686 = vsel %vm2430, %v2247, %v2558
    %v2687 = vsel %vm2431, %v2251, %v2559
    %v2688 = vsel %vm2432, %v2253, %v2560
    %v2689 = vsel %vm2433, %v2255, %v2561
    %v2690 = vsel %vm2434, %v2257, %v2562
    %v2691 = vsel %vm2435, %v2261, %v2563
    %v2692 = vsel %vm2436, %v2263, %v2564
    %v2693 = vsel %vm2437, %v2265, %v2565
    %v2694 = vsel %vm2438, %v2267, %v2566
    %v2695 = vsel %vm2439, %v2271, %v2567
    %v2696 = vsel %vm2440, %v2273, %v2568
    %v2697 = vsel %vm2441, %v2275, %v2569
    %v2698 = vsel %vm2442, %v2277, %v2570
    %v2699 = vsel %vm2443, %v2281, %v2571
    %v2700 = vsel %vm2444, %v2283, %v2572
    %v2701 = vsel %vm2445, %v2285, %v2573
    %v2702 = vsel %vm2446, %v2287, %v2574
    %v2703 = vsel %vm2447, %v2291, %v2575
    %v2704 = vsel %vm2448, %v2293, %v2576
    %v2705 = vsel %vm2449, %v2295, %v2577
    %v2706 = vsel %vm2450, %v2297, %v2578
    %v2707 = vsel %vm2451, %v2301, %v2579
    %v2708 = vsel %vm2452, %v2303, %v2580
    %v2709 = vsel %vm2453, %v2305, %v2581
    %v2710 = vsel %vm2454, %v2307, %v2582
    %v2711 = vsel %vm2455, %v2311, %v2583
    %v2712 = vsel %vm2456, %v2313, %v2584
    %v2713 = vsel %vm2457, %v2315, %v2585
    %v2714 = vsel %vm2458, %v2317, %v2586
    %v2715 = vsel %vm2459, %v2321, %v2587
    %v2716 = vsel %vm2460, %v2323, %v2588
    %v2717 = vsel %vm2461, %v2325, %v2589
    %v2718 = vsel %vm2462, %v2327, %v2590
    %v2719 = vsel %vm2463, %v2331, %v2591
    %v2720 = vsel %vm2464, %v2333, %v2592
    %v2721 = vsel %vm2465, %v2335, %v2593
    %v2722 = vsel %vm2466, %v2337, %v2594
    %v2723 = vpack.c.bf16 %v2597, %v2595
    %v2724 = vpack.c.bf16 %v2598, %v2596
    %v2725 = vpack.c.bf16 %v2601, %v2599
    %v2726 = vpack.c.bf16 %v2602, %v2600
    %v2727 = vpack.c.bf16 %v2605, %v2603
    %v2728 = vpack.c.bf16 %v2606, %v2604
    %v2729 = vpack.c.bf16 %v2609, %v2607
    %v2730 = vpack.c.bf16 %v2610, %v2608
    %v2731 = vpack.c.bf16 %v2613, %v2611
    %v2732 = vpack.c.bf16 %v2614, %v2612
    %v2733 = vpack.c.bf16 %v2617, %v2615
    %v2734 = vpack.c.bf16 %v2618, %v2616
    %v2735 = vpack.c.bf16 %v2621, %v2619
    %v2736 = vpack.c.bf16 %v2622, %v2620
    %v2737 = vpack.c.bf16 %v2625, %v2623
    %v2738 = vpack.c.bf16 %v2626, %v2624
    %v2739 = vpack.c.bf16 %v2629, %v2627
    %v2740 = vpack.c.bf16 %v2630, %v2628
    %v2741 = vpack.c.bf16 %v2633, %v2631
    %v2742 = vpack.c.bf16 %v2634, %v2632
    %v2743 = vpack.c.bf16 %v2637, %v2635
    %v2744 = vpack.c.bf16 %v2638, %v2636
    %v2745 = vpack.c.bf16 %v2641, %v2639
    %v2746 = vpack.c.bf16 %v2642, %v2640
    %v2747 = vpack.c.bf16 %v2645, %v2643
    %v2748 = vpack.c.bf16 %v2646, %v2644
    %v2749 = vpack.c.bf16 %v2649, %v2647
    %v2750 = vpack.c.bf16 %v2650, %v2648
    %v2751 = vpack.c.bf16 %v2653, %v2651
    %v2752 = vpack.c.bf16 %v2654, %v2652
    %v2753 = vpack.c.bf16 %v2657, %v2655
    %v2754 = vpack.c.bf16 %v2658, %v2656
    %v2755 = vpack.c.bf16 %v2661, %v2659
    %v2756 = vpack.c.bf16 %v2662, %v2660
    %v2757 = vpack.c.bf16 %v2665, %v2663
    %v2758 = vpack.c.bf16 %v2666, %v2664
    %v2759 = vpack.c.bf16 %v2669, %v2667
    %v2760 = vpack.c.bf16 %v2670, %v2668
    %v2761 = vpack.c.bf16 %v2673, %v2671
    %v2762 = vpack.c.bf16 %v2674, %v2672
    %v2763 = vpack.c.bf16 %v2677, %v2675
    %v2764 = vpack.c.bf16 %v2678, %v2676
    %v2765 = vpack.c.bf16 %v2681, %v2679
    %v2766 = vpack.c.bf16 %v2682, %v2680
    %v2767 = vpack.c.bf16 %v2685, %v2683
    %v2768 = vpack.c.bf16 %v2686, %v2684
    %v2769 = vpack.c.bf16 %v2689, %v2687
    %v2770 = vpack.c.bf16 %v2690, %v2688
    %v2771 = vpack.c.bf16 %v2693, %v2691
    %v2772 = vpack.c.bf16 %v2694, %v2692
    %v2773 = vpack.c.bf16 %v2697, %v2695
    %v2774 = vpack.c.bf16 %v2698, %v2696
    %v2775 = vpack.c.bf16 %v2701, %v2699
    %v2776 = vpack.c.bf16 %v2702, %v2700
    %v2777 = vpack.c.bf16 %v2705, %v2703
    %v2778 = vpack.c.bf16 %v2706, %v2704
    %v2779 = vpack.c.bf16 %v2709, %v2707
    %v2780 = vpack.c.bf16 %v2710, %v2708
    %v2781 = vpack.c.bf16 %v2713, %v2711
    %v2782 = vpack.c.bf16 %v2714, %v2712
    %v2783 = vpack.c.bf16 %v2717, %v2715
    %v2784 = vpack.c.bf16 %v2718, %v2716
    %v2785 = vpack.c.bf16 %v2721, %v2719
    %v2786 = vpack.c.bf16 %v2722, %v2720
    %v2787 = vld [vmem:[%s7] sm:$0xff]
    %v2788 = vld [vmem:[%s7 + $0x8] sm:$0xff]
    %v2791 = vunpack.c.l.b16 %v2787
    %v2792 = vunpack.c.h.b16 %v2787
    %v2793 = vunpack.c.l.b16 %v2788
    %v2794 = vunpack.c.h.b16 %v2788
    %v2795 = vpack.c.b16 %v2791, %v2791
    %v2796 = vpack.c.b16 %v2792, %v2792
    %v2797 = vpack.c.b16 %v2793, %v2793
    %v2798 = vpack.c.b16 %v2794, %v2794
    %2803 = vmatprep.subr.bf16.mxu0 %v2738
    %2804 = vmatpush1.bf16.msra.mxu0 %v2737
    %2805 = vmatprep.subr.bf16.mxu0 %v2736
    %2806 = vmatpush1.bf16.msra.mxu0 %v2735
    %2807 = vmatprep.subr.bf16.mxu0 %v2734
    %2808 = vmatpush1.bf16.msra.mxu0 %v2733
    %2809 = vmatprep.subr.bf16.mxu0 %v2732
    %2810 = vmatpush1.bf16.msra.mxu0 %v2731
    %2811 = vmatprep.subr.bf16.mxu0 %v2730
    %2812 = vmatpush1.bf16.msra.mxu0 %v2729
    %2813 = vmatprep.subr.bf16.mxu0 %v2728
    %2814 = vmatpush1.bf16.msra.mxu0 %v2727
    %2815 = vmatprep.subr.bf16.mxu0 %v2726
    %2816 = vmatpush1.bf16.msra.mxu0 %v2725
    %2817 = vmatprep.subr.bf16.mxu0 %v2724
    %2818 = vmatpush1.bf16.msra.mxu0 %v2723
    %2819 = vmatprep.subr.bf16.mxu0 %v2754
    %2820 = vmatpush2.bf16.msra.mxu0 %v2753
    %2821 = vmatprep.subr.bf16.mxu0 %v2752
    %2822 = vmatpush2.bf16.msra.mxu0 %v2751
    %2823 = vmatprep.subr.bf16.mxu0 %v2750
    %2824 = vmatpush2.bf16.msra.mxu0 %v2749
    %2825 = vmatprep.subr.bf16.mxu0 %v2748
    %2826 = vmatpush2.bf16.msra.mxu0 %v2747
    %2827 = vmatprep.subr.bf16.mxu0 %v2746
    %2828 = vmatpush2.bf16.msra.mxu0 %v2745
    %2829 = vmatprep.subr.bf16.mxu0 %v2744
    %2830 = vmatpush2.bf16.msra.mxu0 %v2743
    %2831 = vmatprep.subr.bf16.mxu0 %v2742
    %2832 = vmatpush2.bf16.msra.mxu0 %v2741
    %2833 = vmatprep.subr.bf16.mxu0 %v2740
    %2834 = vmatpush2.bf16.msra.mxu0 %v2739
    %2835 = vmatprep.mubr.bf16.mxu0 %v2796
    %2836 = vmatmul.mubr.bf16.gmra.mxu0 %v2795
    %v2837 = vpop.f32.mrf.mxu0
    %v2838 = vadd.f32 0.0, %v2837
    %v2839 = vpop.f32.mrf.mxu0
    %v2840 = vadd.f32 0.0, %v2839
    %v2841 = vpop.f32.mrf.mxu0
    %v2842 = vpop.f32.mrf.mxu0
    %2843 = vdwg.mxu0
    %2844 = vmatprep.subr.bf16.mxu0 %v2770
    %2845 = vmatpush1.bf16.msra.mxu0 %v2769
    %2846 = vmatprep.subr.bf16.mxu0 %v2768
    %2847 = vmatpush1.bf16.msra.mxu0 %v2767
    %2848 = vmatprep.subr.bf16.mxu0 %v2766
    %2849 = vmatpush1.bf16.msra.mxu0 %v2765
    %2850 = vmatprep.subr.bf16.mxu0 %v2764
    %2851 = vmatpush1.bf16.msra.mxu0 %v2763
    %2852 = vmatprep.subr.bf16.mxu0 %v2762
    %2853 = vmatpush1.bf16.msra.mxu0 %v2761
    %2854 = vmatprep.subr.bf16.mxu0 %v2760
    %2855 = vmatpush1.bf16.msra.mxu0 %v2759
    %2856 = vmatprep.subr.bf16.mxu0 %v2758
    %2857 = vmatpush1.bf16.msra.mxu0 %v2757
    %2858 = vmatprep.subr.bf16.mxu0 %v2756
    %2859 = vmatpush1.bf16.msra.mxu0 %v2755
    %2860 = vmatprep.subr.bf16.mxu0 %v2786
    %2861 = vmatpush2.bf16.msra.mxu0 %v2785
    %2862 = vmatprep.subr.bf16.mxu0 %v2784
    %2863 = vmatpush2.bf16.msra.mxu0 %v2783
    %2864 = vmatprep.subr.bf16.mxu0 %v2782
    %2865 = vmatpush2.bf16.msra.mxu0 %v2781
    %2866 = vmatprep.subr.bf16.mxu0 %v2780
    %2867 = vmatpush2.bf16.msra.mxu0 %v2779
    %2868 = vmatprep.subr.bf16.mxu0 %v2778
    %2869 = vmatpush2.bf16.msra.mxu0 %v2777
    %2870 = vmatprep.subr.bf16.mxu0 %v2776
    %2871 = vmatpush2.bf16.msra.mxu0 %v2775
    %2872 = vmatprep.subr.bf16.mxu0 %v2774
    %2873 = vmatpush2.bf16.msra.mxu0 %v2773
    %2874 = vmatprep.subr.bf16.mxu0 %v2772
    %2875 = vmatpush2.bf16.msra.mxu0 %v2771
    %2876 = vmatprep.mubr.bf16.mxu0 %v2798
    %2877 = vmatmul.mubr.bf16.gmra.mxu0 %v2797
    %v2878 = vpop.f32.mrf.mxu0
    %v2879 = vadd.f32 %v2838, %v2878
    %v2880 = vpop.f32.mrf.mxu0
    %v2881 = vadd.f32 %v2840, %v2880
    %v2882 = vpop.f32.mrf.mxu0
    %v2883 = vpop.f32.mrf.mxu0
    %2884 = vdwg.mxu0
    %v2885 = vld [vmem:[%s8] sm:$0x1]
    %2887 = vset.pattern.permute.xlu0 0
    %2888 = vperm.xlu0 %2887, %v2885
    %v2889 = vpop.permute.xlu0 %2888
    %v2891 = vadd.f32 %v2879, %v2889
    %v2892 = vadd.f32 %v2881, %v2889
    %v2893 = vtanh.pop %v2891
    %v2894 = vtanh.pop %v2892
    %v2897 = vcombine.low %v2893, %v2894
    %v2899 = vunpack.c.l.s4 1966171168
    %v2900 = vunpack.c.0.s8 %v2899
    %v2901 = vlaneseq
    %v2902 = vshrl.u32 %v2901, 7
    %v2903 = vsub.s32 %v2900, %v2902
    %v2904 = vrot.slane %v2897, %v2903
    %v2906 = vunpack.c.l.s4 1966171168
    %v2907 = vunpack.c.0.s8 %v2906
    %v2908 = vlaneseq
    %v2909 = vshrl.u32 %v2908, 7
    %v2910 = vsub.s32 %v2907, %v2909
    %v2911 = vrot.slane %v2904, %v2910
    %v2913 = vlaneseq
    %vm2914 = vcmp.ge.s32.totalorder %v2913, 0
    %vm2915 = vcmp.lt.s32.totalorder %v2913, 256
    %vm2916 = vmand %vm2914, %vm2915
    %2917 = vst.msk [vmem:[#allocation5] sm:$0x3] %vm2916, %v2911
    // Predicated region
    $region42: #{tpu_custom_call.1} parent=1 // pred_check
      _
    $region43: #{tpu_custom_call.1} parent=1 // pred_check_branch
      %2919 = sbr.rel (0) target = $region45
    $region44: #{tpu_custom_call.1} parent=1 // pred_region
      %s2921 = ssub.s32 32, 32
      %2922 = vsyncadd [#allocation4], %s2921
      %s2924 = sshll.u32 [#allocation5], 4
      %s2925 = int_to_ptr.vmem [resolvable:$true] %s2924
      %2927 = dma.vmem_to_hbm [thread:$0]  %s2925, 32, %s9, [#allocation4]
    $region45: #{tpu_custom_call.1} parent=1 // pred_fallthru
      _
    // Predicated region
    $region46: #{tpu_custom_call.1} parent=1 // pred_check
      _
    $region47: #{tpu_custom_call.1} parent=1 // pred_check_branch
      %2929 = sbr.rel (0) target = $region49
    $region48: #{tpu_custom_call.1} parent=1 // pred_region
      %2930 = dma.done [#allocation4], 32
    $region49: #{tpu_custom_call.1} parent=1 // pred_fallthru
      _
    %2931 = vsyncpa [#allocation3], 1
    %2932 = vsyncpa [#allocation4], 1

</llo_original>
